<compile_context>
chip_gen: v7x
topology: tpu7x:2x2x1
jax: 0.10.0
libtpu: 0.0.40
codegen_flags: <defaults>
</compile_context>

<pallas_src>
import jax
import jax.numpy as jnp
from jax.experimental import pallas as pl
from jax.experimental.pallas import tpu as pltpu


def ffn_kernel(x_ref, w1_ref, b1_ref, w2_ref, b2_ref, o_ref, acc_ref):
    # x_ref: (tm, E)   w1_ref: (E, th)  b1_ref: (1, th)
    # w2_ref: (th, E)  b2_ref: (1, E)   o_ref: (tm, E)  acc_ref: (tm, E) f32
    k = pl.program_id(1)
    nk = pl.num_programs(1)

    @pl.when(k == 0)
    def _():
        acc_ref[...] = jnp.zeros_like(acc_ref)

    # First linear (this H-tile): MXU matmul in the input dtype, f32 accumulation.
    h = jnp.dot(x_ref[...], w1_ref[...], preferred_element_type=jnp.float32)
    h = h + b1_ref[...].astype(jnp.float32)

    # GELU (tanh approximation), matching the reference PyTorch GELU.
    # Factored polynomial: h + 0.044715*h^3 == h * (1 + 0.044715*h*h); tanh -> EUP.
    c = jnp.float32(0.7978845608028654)  # sqrt(2/pi)
    inner = c * h * (1.0 + 0.044715 * h * h)
    g = 0.5 * h * (1.0 + jnp.tanh(inner))

    # Second linear: partial contribution of this H-tile, accumulated in f32.
    acc_ref[...] += jnp.dot(g.astype(w2_ref.dtype), w2_ref[...],
                            preferred_element_type=jnp.float32)

    @pl.when(k == nk - 1)
    def _():
        o_ref[...] = (acc_ref[...] + b2_ref[...].astype(jnp.float32)
                      ).astype(o_ref.dtype)


def _round_up(v, m):
    return ((v + m - 1) // m) * m


def _vmem_budget_bytes():
    # Per-generation budget: ~80% of physical VMEM leaves headroom for Mosaic
    # internal scratch (v5e/v6e ~102 MiB, v7x ~51 MiB). Conservative fallback
    # if the query is unavailable.
    cap = None
    try:
        cap = getattr(pltpu.get_tpu_info(), "vmem_capacity_bytes", None)
    except Exception:
        cap = None
    if not cap:
        cap = 64 << 20
    return int(cap * 0.8)


def _vmem_need_bytes(tm, E, th, nk, x_isz, w_isz, out_isz):
    wbuf = 1 if nk == 1 else 2              # resident weights are single-buffered
    x_b = 2 * tm * E * x_isz                # x tile, double-buffered
    o_b = 2 * tm * E * out_isz              # out tile, double-buffered
    w_b = wbuf * 2 * E * th * w_isz         # W1 tile + W2 tile
    b_b = wbuf * th * w_isz + E * w_isz     # b1 tile + b2
    acc_b = tm * E * 4                      # f32 accumulator scratch
    gelu_b = 4 * tm * th * 4                # h / inner / tanh / g f32 slabs
    return int((x_b + o_b + w_b + b_b + acc_b + gelu_b) * 1.15) + (2 << 20)


def _choose_tiling(E, H, tm_target, x_isz, w_isz, out_isz, budget):
    # M-tile candidates (multiples of 8, descending from the target).
    tm_list, t = [], tm_target
    while True:
        tm_list.append(t)
        if t <= 8:
            break
        t = max(8, (t // 2) // 8 * 8)
    # H-tile candidates: divisors of H that are lane-dense (multiples of 128),
    # descending. th == H means fully-resident weights (nk == 1). Restricting to
    # divisors keeps every H-tile fully in-bounds (no garbage accumulation).
    if H % 128 == 0:
        th_list = [d for d in range(H, 127, -128) if H % d == 0]
    else:
        th_list = [H]
    best = None
    for tm in tm_list:              # prefer keeping MXU rows (tm) large
        for th in th_list:          # then the largest H-tile that fits
            nk = pl.cdiv(H, th)
            need = _vmem_need_bytes(tm, E, th, nk, x_isz, w_isz, out_isz)
            if need <= budget:
                return tm, th, need
            if best is None or need < best[2]:
                best = (tm, th, need)
    return best  # nothing fits the budget; best effort (limit = need, never below)


def feed_forward(x, w1, b1, w2, b2, *, tm=None, compute_dtype=None):
    """x: (B, T, E). w1: (E, H), b1: (H,), w2: (H, E), b2: (E,).
    Weights are stored as (in, out), i.e. the transpose of nn.Linear.weight."""
    B, T, E = x.shape
    H = w1.shape[1]
    M = B * T

    if compute_dtype is not None:
        # Optional bf16 fast path (biggest win on v5e); accumulation stays f32.
        x = x.astype(compute_dtype)
        w1 = w1.astype(compute_dtype)
        w2 = w2.astype(compute_dtype)

    out_dtype = x.dtype
    x_isz = jnp.dtype(x.dtype).itemsize
    w_isz = jnp.dtype(w1.dtype).itemsize
    out_isz = jnp.dtype(out_dtype).itemsize

    budget = _vmem_budget_bytes()

    # Per-generation default M-tile: 512 when VMEM is roomy (v5e/v6e), else 256.
    if tm is None:
        tm = 512 if budget >= (80 << 20) else 256
    tm = max(8, (tm // 8) * 8)
    M_pad = _round_up(M, 8)
    if M_pad <= tm:
        # Split small problems into >=2 M-tiles so both v7x TensorCores get work
        # on the "parallel" axis (harmless on single-TC v5e/v6e).
        tm = max(8, _round_up(pl.cdiv(M, 2), 8))
    else:
        tm = min(tm, M_pad)

    tm, th, need = _choose_tiling(E, H, tm, x_isz, w_isz, out_isz, budget)
    nk = pl.cdiv(H, th)
    grid_m = pl.cdiv(M, tm)
    vmem_limit = max(8 << 20, need)  # never clamp below the computed need

    x2d = x.reshape(M, E)
    b1_2d = b1.reshape(1, H)
    b2_2d = b2.reshape(1, E)

    weight_bytes = int((w1.size + w2.size + b1.size + b2.size) * w_isz)
    cost = pl.CostEstimate(
        flops=4 * M * E * H,                         # two matmuls, 2*M*E*H each
        transcendentals=M * H,                       # one tanh per hidden element
        bytes_accessed=int(x2d.size * x_isz + M * E * out_isz
                           + weight_bytes * (1 if nk == 1 else grid_m)),
    )

    def _run(use_pipeline_mode):
        # Single-buffer anything whose block index never changes (nothing to
        # double-buffer); stream W1/b1/W2 along the "arbitrary" H axis otherwise.
        resident = pl.Buffered(1) if use_pipeline_mode else None
        w_mode = resident if nk == 1 else None
        grid_spec = pltpu.PrefetchScalarGridSpec(
            num_scalar_prefetch=0,
            grid=(grid_m, nk),
            in_specs=[
                pl.BlockSpec((tm, E), lambda i, k: (i, 0)),   # x tile (streamed)
                pl.BlockSpec((E, th), lambda i, k: (0, k), pipeline_mode=w_mode),
                pl.BlockSpec((1, th), lambda i, k: (0, k), pipeline_mode=w_mode),
                pl.BlockSpec((th, E), lambda i, k: (k, 0), pipeline_mode=w_mode),
                pl.BlockSpec((1, E), lambda i, k: (0, 0), pipeline_mode=resident),
            ],
            out_specs=pl.BlockSpec((tm, E), lambda i, k: (i, 0)),
            scratch_shapes=[pltpu.VMEM((tm, E), jnp.float32)],
        )
        call = pl.pallas_call(
            ffn_kernel,
            out_shape=jax.ShapeDtypeStruct((M, E), out_dtype),
            grid_spec=grid_spec,
            compiler_params=pltpu.CompilerParams(
                dimension_semantics=("parallel", "arbitrary"),
                vmem_limit_bytes=vmem_limit,
            ),
            cost_estimate=cost,
        )
        return call(x2d, w1, b1_2d, w2, b2_2d)

    try:
        out2d = _run(True)
    except Exception:
        # pipeline_mode=pl.Buffered(1) not accepted on this build; fall back to
        # default double-buffering (correctness unchanged, slightly more VMEM).
        out2d = _run(False)
    return out2d.reshape(B, T, E)


def reference_ffn(x, w1, b1, w2, b2):
    hp = jax.lax.Precision.HIGHEST
    h = jnp.einsum("bte,eh->bth", x, w1, precision=hp) + b1
    c = jnp.sqrt(2.0 / jnp.pi).astype(jnp.float32)
    g = 0.5 * h * (1.0 + jnp.tanh(c * (h + 0.044715 * h**3)))
    return jnp.einsum("bth,he->bte", g, w2, precision=hp) + b2


if __name__ == "__main__":
    # cfg = {"emb_dim": 128}  -> hidden = 4 * 128 = 512 (lane-dense)
    B, T, E = 2, 8, 128
    H = 4 * E

    key = jax.random.PRNGKey(0)
    kx, kw1, kb1, kw2, kb2 = jax.random.split(key, 5)

    x = jax.random.normal(kx, (B, T, E), dtype=jnp.float32)

    # Params matching nn.Linear(E, H) / nn.Linear(H, E) init ranges;
    # weights stored as (in, out) == PyTorch weight.T
    bound1 = 1.0 / jnp.sqrt(E)
    w1 = jax.random.uniform(kw1, (E, H), minval=-bound1, maxval=bound1, dtype=jnp.float32)
    b1 = jax.random.uniform(kb1, (H,), minval=-bound1, maxval=bound1, dtype=jnp.float32)
    bound2 = 1.0 / jnp.sqrt(H)
    w2 = jax.random.uniform(kw2, (H, E), minval=-bound2, maxval=bound2, dtype=jnp.float32)
    b2 = jax.random.uniform(kb2, (E,), minval=-bound2, maxval=bound2, dtype=jnp.float32)

    out = feed_forward(x, w1, b1, w2, b2)
    out = jax.block_until_ready(out)

    ref = reference_ffn(x, w1, b1, w2, b2)
    assert out.shape == (B, T, E)
    # TODO(synk): at GPT-scale H (>=3072) compare against a same-precision
    # reference or widen tolerance; the kernel uses default MXU precision.
    assert jnp.allclose(out, ref, atol=1e-4, rtol=1e-4), "mismatch vs reference"

    print("KERNEL_OK")
</pallas_src>

<mosaic_0001>
module attributes {stable_mosaic.version = 11 : i64} {
  func.func @ffn_kernel(%arg0: i32, %arg1: i32, %arg2: memref<8x128xf32, #tpu.memory_space<vmem>>, %arg3: memref<128x512xf32, #tpu.memory_space<vmem>>, %arg4: memref<1x512xf32, #tpu.memory_space<vmem>>, %arg5: memref<512x128xf32, #tpu.memory_space<vmem>>, %arg6: memref<1x128xf32, #tpu.memory_space<vmem>>, %arg7: memref<8x128xf32, #tpu.memory_space<vmem>>, %arg8: memref<8x128xf32, #tpu.memory_space<vmem>>) attributes {dimension_semantics = [#tpu.dimension_semantics<parallel>, #tpu.dimension_semantics<arbitrary>], iteration_bounds = array<i64: 2, 1>, scalar_prefetch = 0 : i64, scratch_operands = 1 : i64, tpu.core_type = #tpu.core_type<tc>, window_params = [{transform_indices = @transform_0, window_bounds = array<i64: 8, 128>}, {pipeline_mode = #tpu.pipeline_mode<synchronous>, transform_indices = @transform_1, window_bounds = array<i64: 128, 512>}, {pipeline_mode = #tpu.pipeline_mode<synchronous>, transform_indices = @transform_2, window_bounds = array<i64: 1, 512>}, {pipeline_mode = #tpu.pipeline_mode<synchronous>, transform_indices = @transform_3, window_bounds = array<i64: 512, 128>}, {pipeline_mode = #tpu.pipeline_mode<synchronous>, transform_indices = @transform_4, window_bounds = array<i64: 1, 128>}, {transform_indices = @transform_5, window_bounds = array<i64: 8, 128>}]} {
    %c0_i32 = arith.constant 0 : i32
    %0 = arith.cmpi eq, %arg1, %c0_i32 : i32
    %1 = arith.extui %0 : i1 to i32
    %c0_i32_0 = arith.constant 0 : i32
    %2 = arith.cmpi ne, %1, %c0_i32_0 : i32
    scf.if %2 {
      %cst_20 = arith.constant 0.000000e+00 : f32
      %31 = vector.broadcast %cst_20 : f32 to vector<8x128xf32>
      %c0_21 = arith.constant 0 : index
      %c0_22 = arith.constant 0 : index
      %32 = vector.load %arg8[%c0_21, %c0_22] : memref<8x128xf32, #tpu.memory_space<vmem>>, vector<8x128xf32>
      tpu.vector_store %arg8[%c0_21, %c0_22], %31 {strides = array<i32>} : memref<8x128xf32, #tpu.memory_space<vmem>>, vector<8x128xf32>,
    } else {
    }
    %c0 = arith.constant 0 : index
    %c0_1 = arith.constant 0 : index
    %3 = vector.load %arg2[%c0, %c0_1] : memref<8x128xf32, #tpu.memory_space<vmem>>, vector<8x128xf32>
    %c0_2 = arith.constant 0 : index
    %c0_3 = arith.constant 0 : index
    %4 = vector.load %arg3[%c0_2, %c0_3] : memref<128x512xf32, #tpu.memory_space<vmem>>, vector<128x512xf32>
    %cst = arith.constant dense<0.000000e+00> : vector<8x512xf32>
    %5 = tpu.matmul %3, %4, %cst {dimension_numbers = #tpu.dot_dimension_numbers<[1], [0], [0], [1], [0, 0, 1, 1], [], []>} : vector<8x128xf32>, vector<128x512xf32>, vector<8x512xf32> -> vector<8x512xf32>
    %c0_4 = arith.constant 0 : index
    %c0_5 = arith.constant 0 : index
    %6 = vector.load %arg4[%c0_4, %c0_5] : memref<1x512xf32, #tpu.memory_space<vmem>>, vector<1x512xf32>
    %7 = vector.broadcast %6 : vector<1x512xf32> to vector<8x512xf32>
    %8 = arith.addf %5, %7 : vector<8x512xf32>
    %cst_6 = arith.constant 0.797884583 : f32
    %9 = vector.broadcast %cst_6 : f32 to vector<8x512xf32>
    %10 = arith.mulf %9, %8 : vector<8x512xf32>
    %cst_7 = arith.constant 4.471500e-02 : f32
    %11 = vector.broadcast %cst_7 : f32 to vector<8x512xf32>
    %12 = arith.mulf %11, %8 : vector<8x512xf32>
    %13 = arith.mulf %12, %8 : vector<8x512xf32>
    %cst_8 = arith.constant 1.000000e+00 : f32
    %14 = vector.broadcast %cst_8 : f32 to vector<8x512xf32>
    %15 = arith.addf %14, %13 : vector<8x512xf32>
    %16 = arith.mulf %10, %15 : vector<8x512xf32>
    %cst_9 = arith.constant 5.000000e-01 : f32
    %17 = vector.broadcast %cst_9 : f32 to vector<8x512xf32>
    %18 = arith.mulf %17, %8 : vector<8x512xf32>
    %19 = math.tanh %16 : vector<8x512xf32>
    %cst_10 = arith.constant 1.000000e+00 : f32
    %20 = vector.broadcast %cst_10 : f32 to vector<8x512xf32>
    %21 = arith.addf %20, %19 : vector<8x512xf32>
    %22 = arith.mulf %18, %21 : vector<8x512xf32>
    %c0_11 = arith.constant 0 : index
    %c0_12 = arith.constant 0 : index
    %23 = vector.load %arg8[%c0_11, %c0_12] : memref<8x128xf32, #tpu.memory_space<vmem>>, vector<8x128xf32>
    %c0_13 = arith.constant 0 : index
    %c0_14 = arith.constant 0 : index
    %24 = vector.load %arg5[%c0_13, %c0_14] : memref<512x128xf32, #tpu.memory_space<vmem>>, vector<512x128xf32>
    %cst_15 = arith.constant dense<0.000000e+00> : vector<8x128xf32>
    %25 = tpu.matmul %22, %24, %cst_15 {dimension_numbers = #tpu.dot_dimension_numbers<[1], [0], [0], [1], [0, 0, 1, 1], [], []>} : vector<8x512xf32>, vector<512x128xf32>, vector<8x128xf32> -> vector<8x128xf32>
    %26 = arith.addf %23, %25 : vector<8x128xf32>
    %c0_16 = arith.constant 0 : index
    %c0_17 = arith.constant 0 : index
    %27 = vector.load %arg8[%c0_16, %c0_17] : memref<8x128xf32, #tpu.memory_space<vmem>>, vector<8x128xf32>
    tpu.vector_store %arg8[%c0_16, %c0_17], %26 {strides = array<i32>} : memref<8x128xf32, #tpu.memory_space<vmem>>, vector<8x128xf32>,
    %c0_i32_18 = arith.constant 0 : i32
    %28 = arith.cmpi eq, %arg1, %c0_i32_18 : i32
    %29 = arith.extui %28 : i1 to i32
    %c0_i32_19 = arith.constant 0 : i32
    %30 = arith.cmpi ne, %29, %c0_i32_19 : i32
    scf.if %30 {
      %c0_20 = arith.constant 0 : index
      %c0_21 = arith.constant 0 : index
      %31 = vector.load %arg8[%c0_20, %c0_21] : memref<8x128xf32, #tpu.memory_space<vmem>>, vector<8x128xf32>
      %c0_22 = arith.constant 0 : index
      %c0_23 = arith.constant 0 : index
      %32 = vector.load %arg6[%c0_22, %c0_23] : memref<1x128xf32, #tpu.memory_space<vmem>>, vector<1x128xf32>
      %33 = vector.broadcast %32 : vector<1x128xf32> to vector<8x128xf32>
      %34 = arith.addf %31, %33 : vector<8x128xf32>
      %c0_24 = arith.constant 0 : index
      %c0_25 = arith.constant 0 : index
      %35 = vector.load %arg7[%c0_24, %c0_25] : memref<8x128xf32, #tpu.memory_space<vmem>>, vector<8x128xf32>
      tpu.vector_store %arg7[%c0_24, %c0_25], %34 {strides = array<i32>} : memref<8x128xf32, #tpu.memory_space<vmem>>, vector<8x128xf32>,
    } else {
    }
    return
  }
  func.func @transform_0(%arg0: i32, %arg1: i32) -> (i32, i32) {
    %c0_i32 = arith.constant 0 : i32
    %c0_i32_0 = arith.constant 0 : i32
    return %arg0, %c0_i32 : i32, i32
  }
  func.func @transform_1(%arg0: i32, %arg1: i32) -> (i32, i32) {
    %c0_i32 = arith.constant 0 : i32
    %c0_i32_0 = arith.constant 0 : i32
    return %c0_i32, %arg1 : i32, i32
  }
  func.func @transform_2(%arg0: i32, %arg1: i32) -> (i32, i32) {
    %c0_i32 = arith.constant 0 : i32
    %c0_i32_0 = arith.constant 0 : i32
    return %c0_i32, %arg1 : i32, i32
  }
  func.func @transform_3(%arg0: i32, %arg1: i32) -> (i32, i32) {
    %c0_i32 = arith.constant 0 : i32
    %c0_i32_0 = arith.constant 0 : i32
    return %arg1, %c0_i32 : i32, i32
  }
  func.func @transform_4(%arg0: i32, %arg1: i32) -> (i32, i32) {
    %c0_i32 = arith.constant 0 : i32
    %c0_i32_0 = arith.constant 0 : i32
    %c0_i32_1 = arith.constant 0 : i32
    return %c0_i32, %c0_i32_0 : i32, i32
  }
  func.func @transform_5(%arg0: i32, %arg1: i32) -> (i32, i32) {
    %c0_i32 = arith.constant 0 : i32
    %c0_i32_0 = arith.constant 0 : i32
    return %arg0, %c0_i32 : i32, i32
  }
}

module attributes {stable_mosaic.version = 11 : i64} {
  func.func @ffn_kernel(%arg0: i32, %arg1: i32, %arg2: memref<8x128xf32, #tpu.memory_space<vmem>>, %arg3: memref<128x512xf32, #tpu.memory_space<vmem>>, %arg4: memref<1x512xf32, #tpu.memory_space<vmem>>, %arg5: memref<512x128xf32, #tpu.memory_space<vmem>>, %arg6: memref<1x128xf32, #tpu.memory_space<vmem>>, %arg7: memref<8x128xf32, #tpu.memory_space<vmem>>, %arg8: memref<8x128xf32, #tpu.memory_space<vmem>>) attributes {dimension_semantics = [#tpu.dimension_semantics<parallel>, #tpu.dimension_semantics<arbitrary>], iteration_bounds = array<i64: 2, 1>, scalar_prefetch = 0 : i64, scratch_operands = 1 : i64, tpu.core_type = #tpu.core_type<tc>, window_params = [{transform_indices = @transform_0, window_bounds = array<i64: 8, 128>}, {transform_indices = @transform_1, window_bounds = array<i64: 128, 512>}, {transform_indices = @transform_2, window_bounds = array<i64: 1, 512>}, {transform_indices = @transform_3, window_bounds = array<i64: 512, 128>}, {pipeline_mode = #tpu.pipeline_mode<synchronous>, transform_indices = @transform_4, window_bounds = array<i64: 1, 128>}, {transform_indices = @transform_5, window_bounds = array<i64: 8, 128>}]} {
    %c0_i32 = arith.constant 0 : i32
    %0 = arith.cmpi eq, %arg1, %c0_i32 : i32
    %1 = arith.extui %0 : i1 to i32
    %c0_i32_0 = arith.constant 0 : i32
    %2 = arith.cmpi ne, %1, %c0_i32_0 : i32
    scf.if %2 {
      %cst_20 = arith.constant 0.000000e+00 : f32
      %31 = vector.broadcast %cst_20 : f32 to vector<8x128xf32>
      %c0_21 = arith.constant 0 : index
      %c0_22 = arith.constant 0 : index
      %32 = vector.load %arg8[%c0_21, %c0_22] : memref<8x128xf32, #tpu.memory_space<vmem>>, vector<8x128xf32>
      tpu.vector_store %arg8[%c0_21, %c0_22], %31 {strides = array<i32>} : memref<8x128xf32, #tpu.memory_space<vmem>>, vector<8x128xf32>,
    } else {
    }
    %c0 = arith.constant 0 : index
    %c0_1 = arith.constant 0 : index
    %3 = vector.load %arg2[%c0, %c0_1] : memref<8x128xf32, #tpu.memory_space<vmem>>, vector<8x128xf32>
    %c0_2 = arith.constant 0 : index
    %c0_3 = arith.constant 0 : index
    %4 = vector.load %arg3[%c0_2, %c0_3] : memref<128x512xf32, #tpu.memory_space<vmem>>, vector<128x512xf32>
    %cst = arith.constant dense<0.000000e+00> : vector<8x512xf32>
    %5 = tpu.matmul %3, %4, %cst {dimension_numbers = #tpu.dot_dimension_numbers<[1], [0], [0], [1], [0, 0, 1, 1], [], []>} : vector<8x128xf32>, vector<128x512xf32>, vector<8x512xf32> -> vector<8x512xf32>
    %c0_4 = arith.constant 0 : index
    %c0_5 = arith.constant 0 : index
    %6 = vector.load %arg4[%c0_4, %c0_5] : memref<1x512xf32, #tpu.memory_space<vmem>>, vector<1x512xf32>
    %7 = vector.broadcast %6 : vector<1x512xf32> to vector<8x512xf32>
    %8 = arith.addf %5, %7 : vector<8x512xf32>
    %cst_6 = arith.constant 0.797884583 : f32
    %9 = vector.broadcast %cst_6 : f32 to vector<8x512xf32>
    %10 = arith.mulf %9, %8 : vector<8x512xf32>
    %cst_7 = arith.constant 4.471500e-02 : f32
    %11 = vector.broadcast %cst_7 : f32 to vector<8x512xf32>
    %12 = arith.mulf %11, %8 : vector<8x512xf32>
    %13 = arith.mulf %12, %8 : vector<8x512xf32>
    %cst_8 = arith.constant 1.000000e+00 : f32
    %14 = vector.broadcast %cst_8 : f32 to vector<8x512xf32>
    %15 = arith.addf %14, %13 : vector<8x512xf32>
    %16 = arith.mulf %10, %15 : vector<8x512xf32>
    %cst_9 = arith.constant 5.000000e-01 : f32
    %17 = vector.broadcast %cst_9 : f32 to vector<8x512xf32>
    %18 = arith.mulf %17, %8 : vector<8x512xf32>
    %19 = math.tanh %16 : vector<8x512xf32>
    %cst_10 = arith.constant 1.000000e+00 : f32
    %20 = vector.broadcast %cst_10 : f32 to vector<8x512xf32>
    %21 = arith.addf %20, %19 : vector<8x512xf32>
    %22 = arith.mulf %18, %21 : vector<8x512xf32>
    %c0_11 = arith.constant 0 : index
    %c0_12 = arith.constant 0 : index
    %23 = vector.load %arg8[%c0_11, %c0_12] : memref<8x128xf32, #tpu.memory_space<vmem>>, vector<8x128xf32>
    %c0_13 = arith.constant 0 : index
    %c0_14 = arith.constant 0 : index
    %24 = vector.load %arg5[%c0_13, %c0_14] : memref<512x128xf32, #tpu.memory_space<vmem>>, vector<512x128xf32>
    %cst_15 = arith.constant dense<0.000000e+00> : vector<8x128xf32>
    %25 = tpu.matmul %22, %24, %cst_15 {dimension_numbers = #tpu.dot_dimension_numbers<[1], [0], [0], [1], [0, 0, 1, 1], [], []>} : vector<8x512xf32>, vector<512x128xf32>, vector<8x128xf32> -> vector<8x128xf32>
    %26 = arith.addf %23, %25 : vector<8x128xf32>
    %c0_16 = arith.constant 0 : index
    %c0_17 = arith.constant 0 : index
    %27 = vector.load %arg8[%c0_16, %c0_17] : memref<8x128xf32, #tpu.memory_space<vmem>>, vector<8x128xf32>
    tpu.vector_store %arg8[%c0_16, %c0_17], %26 {strides = array<i32>} : memref<8x128xf32, #tpu.memory_space<vmem>>, vector<8x128xf32>,
    %c0_i32_18 = arith.constant 0 : i32
    %28 = arith.cmpi eq, %arg1, %c0_i32_18 : i32
    %29 = arith.extui %28 : i1 to i32
    %c0_i32_19 = arith.constant 0 : i32
    %30 = arith.cmpi ne, %29, %c0_i32_19 : i32
    scf.if %30 {
      %c0_20 = arith.constant 0 : index
      %c0_21 = arith.constant 0 : index
      %31 = vector.load %arg8[%c0_20, %c0_21] : memref<8x128xf32, #tpu.memory_space<vmem>>, vector<8x128xf32>
      %c0_22 = arith.constant 0 : index
      %c0_23 = arith.constant 0 : index
      %32 = vector.load %arg6[%c0_22, %c0_23] : memref<1x128xf32, #tpu.memory_space<vmem>>, vector<1x128xf32>
      %33 = vector.broadcast %32 : vector<1x128xf32> to vector<8x128xf32>
      %34 = arith.addf %31, %33 : vector<8x128xf32>
      %c0_24 = arith.constant 0 : index
      %c0_25 = arith.constant 0 : index
      %35 = vector.load %arg7[%c0_24, %c0_25] : memref<8x128xf32, #tpu.memory_space<vmem>>, vector<8x128xf32>
      tpu.vector_store %arg7[%c0_24, %c0_25], %34 {strides = array<i32>} : memref<8x128xf32, #tpu.memory_space<vmem>>, vector<8x128xf32>,
    } else {
    }
    return
  }
  func.func @transform_0(%arg0: i32, %arg1: i32) -> (i32, i32) {
    %c0_i32 = arith.constant 0 : i32
    %c0_i32_0 = arith.constant 0 : i32
    return %arg0, %c0_i32 : i32, i32
  }
  func.func @transform_1(%arg0: i32, %arg1: i32) -> (i32, i32) {
    %c0_i32 = arith.constant 0 : i32
    %c0_i32_0 = arith.constant 0 : i32
    return %c0_i32, %arg1 : i32, i32
  }
  func.func @transform_2(%arg0: i32, %arg1: i32) -> (i32, i32) {
    %c0_i32 = arith.constant 0 : i32
    %c0_i32_0 = arith.constant 0 : i32
    return %c0_i32, %arg1 : i32, i32
  }
  func.func @transform_3(%arg0: i32, %arg1: i32) -> (i32, i32) {
    %c0_i32 = arith.constant 0 : i32
    %c0_i32_0 = arith.constant 0 : i32
    return %arg1, %c0_i32 : i32, i32
  }
  func.func @transform_4(%arg0: i32, %arg1: i32) -> (i32, i32) {
    %c0_i32 = arith.constant 0 : i32
    %c0_i32_0 = arith.constant 0 : i32
    %c0_i32_1 = arith.constant 0 : i32
    return %c0_i32, %c0_i32_0 : i32, i32
  }
  func.func @transform_5(%arg0: i32, %arg1: i32) -> (i32, i32) {
    %c0_i32 = arith.constant 0 : i32
    %c0_i32_0 = arith.constant 0 : i32
    return %arg0, %c0_i32 : i32, i32
  }
}

</mosaic_0001>

<llo_original>
// kernel: tpu_custom_call.1
$region0: #{tpu_custom_call.1}
  #allocation0 [shape = 'u32[]', space=smem, size = 0x4, offset = 0x4, fixed_abs, tag = 'smem constant byte address 0x4 - core index']
  #allocation1 [shape = 'u32[144,128]{1,0:T(1,128)}', space=vmem, size = 0x12000, scoped, tag = 'internal scratch']
  #allocation2 [shape = 'f32[8,128]{1,0:T(8,128)}', space=vmem, size = 0x1000, scoped, tag = 'scratch operand']
  %s0 = inlined_call_operand.hbm [shape: f32[16,128], index: 0, kind: input, shape index: {}]
  %s1 = inlined_call_operand.hbm [shape: f32[128,512], index: 1, kind: input, shape index: {}]
  %s2 = inlined_call_operand.vmem [shape: f32[1,512], index: 2, kind: input, shape index: {}]
  %s3 = inlined_call_operand.hbm [shape: f32[512,128], index: 3, kind: input, shape index: {}]
  %s4 = inlined_call_operand.vmem [shape: f32[1,128], index: 4, kind: input, shape index: {}]
  %s5 = inlined_call_operand.hbm [shape: f32[16,128], index: 5, kind: output, shape index: {}]
  %s6 = sld [smem:[#allocation0]]
  $region73: #{tpu_custom_call.1} parent=0
    _
  %s8 = ssub.s32 1, %s6
  %s9 = scalar_select 0, %s8, %s6
  $region1: #{tpu_custom_call.1} parent=0
    #allocation3 [shape = 'u8[8192]{0}', space=vmem, size = 0x2000, scoped, tag = 'input window, operand 0']
    #allocation4 [shape = 's32[2]{0}', space=sflag, size = 0x8, scoped, tag = 'scoped memory for tpu_custom_call.1']
    #allocation5 [shape = 's32[2]{0}', space=sflag, size = 0x8, scoped, tag = 'scoped memory for tpu_custom_call.1']
    #allocation6 [shape = 'u8[262144]{0}', space=vmem, size = 0x40000, scoped, tag = 'input window, operand 1, single buffered']
    #allocation7 [shape = 's32[1]{0}', space=sflag, size = 0x4, scoped, tag = 'scoped memory for tpu_custom_call.1']
    #allocation8 [shape = 'u8[262144]{0}', space=vmem, size = 0x40000, scoped, tag = 'input window, operand 3, single buffered']
    #allocation9 [shape = 'u8[8192]{0}', space=vmem, size = 0x2000, scoped, tag = 'output window, operand 0']
    %10 = vsyncpa [#allocation4], 0
    %s11 = scalar_lea.sflag [#allocation4], 1
    %12 = vsyncpa %s11, 0
    %13 = vsyncpa [#allocation7], 0
    %14 = vsyncpa [#allocation5], 0
    %s15 = scalar_lea.sflag [#allocation5], 1
    %16 = vsyncpa %s15, 0
    loop: start=0, step=1, limit=4
    $region2: #{tpu_custom_call.1} parent=1 // loop_pre_header
      _
    $region3: #{tpu_custom_call.1} parent=1 // loop_header
      %s18 = sphi 0, %s22
      %p19 = scmp.ge.s32.totalorder %s18, 4
      %s25 = sphi 0, %s37
      %s26 = sphi 0, %s33
      %s27 = sphi 0, %s25
      %s28 = sphi 0, %s26
      %s29 = sphi 0, %s27
      %s30 = sphi 0, %s28
      %s40 = sphi 0, %s42
      %s43 = sphi 0, %s40
      %s44 = sphi 0, %s43
      %s60 = sphi 0, %s44
      %s66 = sphi 0, %s68
      %s69 = sphi 0, %s66
      %s70 = sphi 0, %s69
      %s86 = sphi 0, %s70
      %s92 = sphi 0, %s94
      %s95 = sphi 0, %s92
      %s96 = sphi 0, %s95
      %s112 = sphi 0, %s96
      %s118 = sphi 0, %s120
      %s121 = sphi 0, %s118
      %s122 = sphi 0, %s121
      %s138 = sphi 0, %s122
      %s142 = sphi 0, %s142
      %s144 = sphi 0, %s142
      %s145 = sphi 0, %s144
      %s159 = sphi 0, %s145
      %s165 = sphi 0, %s167
      %s168 = sphi 0, %s165
      %s169 = sphi 0, %s168
      %s185 = sphi 0, %s169
    $region4: #{tpu_custom_call.1} parent=1 // loop_header_branch
      %21 = sbr.rel (%p19) target = $region8
    $region5: #{tpu_custom_call.1} parent=1 // loop_body
      %s23 = ssub.s32 %s18, 1
      %s24 = ssub.s32 %s18, 2
      %s31 = sadd.s32 1, %s26
      %p32 = scmp.ge.s32.totalorder %s31, 1
      %s33 = scalar_select %p32, 0, %s31
      %s34 = sadd.s32 1, %s25
      %s35 = scalar_select %p32, %s34, %s25
      %p36 = scmp.ge.s32.totalorder %s35, 2
      %s37 = scalar_select %p36, 0, %s35
      %s38 = ssub.s32 %s25, %s37
      %p39 = scmp.eq.s32.totalorder %s38, 0
      %s41 = sadd.s32 %s40, 1
      %s42 = scalar_select %p39, %s40, %s41
      %p45 = pneg %p39
      %p46 = scmp.eq.s32.totalorder %s18, 1
      %p47 = por %p45, %p46
      %p48 = scmp.ne.s32.totalorder %s40, %s43
      %p49 = scmp.eq.s32.totalorder %s18, 0
      %p50 = por %p48, %p49
      %p51 = scmp.ne.s32.totalorder %s40, %s43
      %p52 = scmp.eq.s32.totalorder %s23, 1
      %p53 = por %p51, %p52
      %p54 = scmp.ne.s32.totalorder %s43, %s44
      %p55 = scmp.eq.s32.totalorder %s23, 0
      %p56 = por %p54, %p55
      %p57 = scmp.ne.s32.totalorder %s43, %s44
      %p58 = scmp.eq.s32.totalorder %s24, 1
      %p59 = por %p57, %p58
      %p61 = scmp.ne.s32.totalorder %s44, %s60
      %p62 = scmp.eq.s32.totalorder %s24, 0
      %p63 = por %p61, %p62
      %s64 = ssub.s32 %s26, %s33
      %p65 = scmp.eq.s32.totalorder %s64, 0
      %s67 = sadd.s32 %s66, 1
      %s68 = scalar_select %p65, %s66, %s67
      %p71 = pneg %p65
      %p72 = scmp.eq.s32.totalorder %s18, 1
      %p73 = por %p71, %p72
      %p74 = scmp.ne.s32.totalorder %s66, %s69
      %p75 = scmp.eq.s32.totalorder %s18, 0
      %p76 = por %p74, %p75
      %p77 = scmp.ne.s32.totalorder %s66, %s69
      %p78 = scmp.eq.s32.totalorder %s23, 1
      %p79 = por %p77, %p78
      %p80 = scmp.ne.s32.totalorder %s69, %s70
      %p81 = scmp.eq.s32.totalorder %s23, 0
      %p82 = por %p80, %p81
      %p83 = scmp.ne.s32.totalorder %s69, %s70
      %p84 = scmp.eq.s32.totalorder %s24, 1
      %p85 = por %p83, %p84
      %p87 = scmp.ne.s32.totalorder %s70, %s86
      %p88 = scmp.eq.s32.totalorder %s24, 0
      %p89 = por %p87, %p88
      %s90 = ssub.s32 %s26, %s33
      %p91 = scmp.eq.s32.totalorder %s90, 0
      %s93 = sadd.s32 %s92, 1
      %s94 = scalar_select %p91, %s92, %s93
      %p97 = pneg %p91
      %p98 = scmp.eq.s32.totalorder %s18, 1
      %p99 = por %p97, %p98
      %p100 = scmp.ne.s32.totalorder %s92, %s95
      %p101 = scmp.eq.s32.totalorder %s18, 0
      %p102 = por %p100, %p101
      %p103 = scmp.ne.s32.totalorder %s92, %s95
      %p104 = scmp.eq.s32.totalorder %s23, 1
      %p105 = por %p103, %p104
      %p106 = scmp.ne.s32.totalorder %s95, %s96
      %p107 = scmp.eq.s32.totalorder %s23, 0
      %p108 = por %p106, %p107
      %p109 = scmp.ne.s32.totalorder %s95, %s96
      %p110 = scmp.eq.s32.totalorder %s24, 1
      %p111 = por %p109, %p110
      %p113 = scmp.ne.s32.totalorder %s96, %s112
      %p114 = scmp.eq.s32.totalorder %s24, 0
      %p115 = por %p113, %p114
      %s116 = ssub.s32 %s26, %s33
      %p117 = scmp.eq.s32.totalorder %s116, 0
      %s119 = sadd.s32 %s118, 1
      %s120 = scalar_select %p117, %s118, %s119
      %p123 = pneg %p117
      %p124 = scmp.eq.s32.totalorder %s18, 1
      %p125 = por %p123, %p124
      %p126 = scmp.ne.s32.totalorder %s118, %s121
      %p127 = scmp.eq.s32.totalorder %s18, 0
      %p128 = por %p126, %p127
      %p129 = scmp.ne.s32.totalorder %s118, %s121
      %p130 = scmp.eq.s32.totalorder %s23, 1
      %p131 = por %p129, %p130
      %p132 = scmp.ne.s32.totalorder %s121, %s122
      %p133 = scmp.eq.s32.totalorder %s23, 0
      %p134 = por %p132, %p133
      %p135 = scmp.ne.s32.totalorder %s121, %s122
      %p136 = scmp.eq.s32.totalorder %s24, 1
      %p137 = por %p135, %p136
      %p139 = scmp.ne.s32.totalorder %s122, %s138
      %p140 = scmp.eq.s32.totalorder %s24, 0
      %p141 = por %p139, %p140
      %s143 = sadd.s32 %s142, 1
      %p146 = scmp.eq.s32.totalorder %s18, 1
      %p147 = scmp.ne.s32.totalorder %s142, %s144
      %p148 = scmp.eq.s32.totalorder %s18, 0
      %p149 = por %p147, %p148
      %p150 = scmp.ne.s32.totalorder %s142, %s144
      %p151 = scmp.eq.s32.totalorder %s23, 1
      %p152 = por %p150, %p151
      %p153 = scmp.ne.s32.totalorder %s144, %s145
      %p154 = scmp.eq.s32.totalorder %s23, 0
      %p155 = por %p153, %p154
      %p156 = scmp.ne.s32.totalorder %s144, %s145
      %p157 = scmp.eq.s32.totalorder %s24, 1
      %p158 = por %p156, %p157
      %p160 = scmp.ne.s32.totalorder %s145, %s159
      %p161 = scmp.eq.s32.totalorder %s24, 0
      %p162 = por %p160, %p161
      %s163 = ssub.s32 %s25, %s37
      %p164 = scmp.eq.s32.totalorder %s163, 0
      %s166 = sadd.s32 %s165, 1
      %s167 = scalar_select %p164, %s165, %s166
      %p170 = pneg %p164
      %p171 = scmp.eq.s32.totalorder %s18, 1
      %p172 = por %p170, %p171
      %p173 = scmp.ne.s32.totalorder %s165, %s168
      %p174 = scmp.eq.s32.totalorder %s18, 0
      %p175 = por %p173, %p174
      %p176 = scmp.ne.s32.totalorder %s165, %s168
      %p177 = scmp.eq.s32.totalorder %s23, 1
      %p178 = por %p176, %p177
      %p179 = scmp.ne.s32.totalorder %s168, %s169
      %p180 = scmp.eq.s32.totalorder %s23, 0
      %p181 = por %p179, %p180
      %p182 = scmp.ne.s32.totalorder %s168, %s169
      %p183 = scmp.eq.s32.totalorder %s24, 1
      %p184 = por %p182, %p183
      %p186 = scmp.ne.s32.totalorder %s169, %s185
      %p187 = scmp.eq.s32.totalorder %s24, 0
      %p188 = por %p186, %p187
      %p189 = scmp.le.s32.totalorder 1, %s18
      %p190 = scmp.lt.s32.totalorder %s18, 3
      %p191 = pnand %p189, %p190
      %p192 = pneg %p191
      // Predicated region
      $region9: #{tpu_custom_call.1} parent=5 // pred_check
        _
      $region10: #{tpu_custom_call.1} parent=5 // pred_check_branch
        %194 = sbr.rel (%p191) target = $region12
      $region11: #{tpu_custom_call.1} parent=5 // pred_region
        %s195 = ssub.s32 %s18, 1
        // Predicated region
        $region13: #{tpu_custom_call.1} parent=11 // pred_check
          %p196 = pneg %p82
        $region14: #{tpu_custom_call.1} parent=11 // pred_check_branch
          %198 = sbr.rel (%p196) target = $region16
        $region15: #{tpu_custom_call.1} parent=11 // pred_region
          %s199 = smul.u32 4, %s28
          %s201 = ssub.s32 8192, 8192
          %202 = vsyncadd [#allocation7], %s201
          %s203 = smul.addr %s199, 128
          %s204 = scalar_lea.hbm %s1, %s203
          %s205 = sshll.u32 [#allocation6], 4
          %s206 = int_to_ptr.vmem [resolvable:$true] %s205
          %211 = dma.hbm_to_vmem [thread:$0]  %s204, 8192, %s206, [#allocation7], 512, 512, 32
        $region16: #{tpu_custom_call.1} parent=11 // pred_fallthru
          _
        // Predicated region
        $region17: #{tpu_custom_call.1} parent=11 // pred_check
          %p212 = pneg %p108
        $region18: #{tpu_custom_call.1} parent=11 // pred_check_branch
          %214 = sbr.rel (%p212) target = $region20
        $region19: #{tpu_custom_call.1} parent=11 // pred_region
          %s215 = smul.u32 4, %s28
          %p216 = scmp.lt.s32.totalorder %s215, 3
          %s217 = scalar_select %p216, %s215, 3
          %s218 = scalar_lea.vmem %s2, %s217
          %s219 = smul.u32 4, %s28
        $region20: #{tpu_custom_call.1} parent=11 // pred_fallthru
          _
        // Predicated region
        $region21: #{tpu_custom_call.1} parent=11 // pred_check
          %p220 = pneg %p134
        $region22: #{tpu_custom_call.1} parent=11 // pred_check_branch
          %222 = sbr.rel (%p220) target = $region24
        $region23: #{tpu_custom_call.1} parent=11 // pred_region
          %s223 = smul.u32 64, %s28
          %s225 = ssub.s32 8192, 8192
          %226 = vsyncadd [#allocation7], %s225
          %s227 = smul.addr %s223, 128
          %s228 = scalar_lea.hbm %s3, %s227
          %s229 = sshll.u32 [#allocation8], 4
          %s230 = int_to_ptr.vmem [resolvable:$true] %s229
          %235 = dma.hbm_to_vmem [thread:$0]  %s228, 8192, %s230, [#allocation7], 128, 128, 8
        $region24: #{tpu_custom_call.1} parent=11 // pred_fallthru
          _
        // Predicated region
        $region25: #{tpu_custom_call.1} parent=11 // pred_check
          %p236 = pneg %p155
        $region26: #{tpu_custom_call.1} parent=11 // pred_check_branch
          %238 = sbr.rel (%p236) target = $region28
        $region27: #{tpu_custom_call.1} parent=11 // pred_region
          _
        $region28: #{tpu_custom_call.1} parent=11 // pred_fallthru
          _
      $region12: #{tpu_custom_call.1} parent=5 // pred_fallthru
        _
      %p239 = scmp.lt.s32.totalorder %s18, 2
      // Predicated region
      $region29: #{tpu_custom_call.1} parent=5 // pred_check
        %p240 = pneg %p239
      $region30: #{tpu_custom_call.1} parent=5 // pred_check_branch
        %242 = sbr.rel (%p240) target = $region32
      $region31: #{tpu_custom_call.1} parent=5 // pred_region
        // Predicated region
        $region33: #{tpu_custom_call.1} parent=31 // pred_check
          %p243 = pneg %p50
        $region34: #{tpu_custom_call.1} parent=31 // pred_check_branch
          %245 = sbr.rel (%p243) target = $region36
        $region35: #{tpu_custom_call.1} parent=31 // pred_region
          %s246 = sand.u32 %s40, 1
          %s247 = scalar_lea.sflag [#allocation4], %s246
          %s248 = sand.u32 %s40, 1
          %s249 = smul.addr %s248, 8
          %s250 = scalar_lea.vmem [#allocation3], %s249
          %s252 = ssub.s32 128, 128
          %253 = vsyncadd %s247, %s252
          %s254 = smul.addr %s25, 128
          %s255 = scalar_lea.hbm %s0, %s254
          %s257 = sshll.u32 %s250, 4
          %s258 = int_to_ptr.vmem [resolvable:$true] %s257
          %260 = dma.hbm_to_vmem [thread:$0]  %s255, 128, %s258, %s247
        $region36: #{tpu_custom_call.1} parent=31 // pred_fallthru
          _
      $region32: #{tpu_custom_call.1} parent=5 // pred_fallthru
        _
      %p261 = scmp.le.s32.totalorder 1, %s18
      %p262 = scmp.lt.s32.totalorder %s18, 3
      %p263 = pnand %p261, %p262
      %p264 = pneg %p263
      // Predicated region
      $region37: #{tpu_custom_call.1} parent=5 // pred_check
        _
      $region38: #{tpu_custom_call.1} parent=5 // pred_check_branch
        %266 = sbr.rel (%p263) target = $region40
      $region39: #{tpu_custom_call.1} parent=5 // pred_region
        %s267 = ssub.s32 %s18, 1
        %s268 = sand.u32 %s43, 1
        %s269 = scalar_lea.sflag [#allocation4], %s268
        %s270 = sand.u32 %s43, 1
        %s271 = smul.addr %s270, 8
        %s272 = scalar_lea.vmem [#allocation3], %s271
        // Predicated region
        $region41: #{tpu_custom_call.1} parent=39 // pred_check
          %p273 = pneg %p56
        $region42: #{tpu_custom_call.1} parent=39 // pred_check_branch
          %275 = sbr.rel (%p273) target = $region44
        $region43: #{tpu_custom_call.1} parent=39 // pred_region
          %276 = dma.done %s269, 128
        $region44: #{tpu_custom_call.1} parent=39 // pred_fallthru
          _
        // Predicated region
        $region45: #{tpu_custom_call.1} parent=39 // pred_check
          %p277 = pneg %p82
        $region46: #{tpu_custom_call.1} parent=39 // pred_check_branch
          %279 = sbr.rel (%p277) target = $region48
        $region47: #{tpu_custom_call.1} parent=39 // pred_region
          %280 = dma.done [#allocation7], 8192
        $region48: #{tpu_custom_call.1} parent=39 // pred_fallthru
          _
        // Predicated region
        $region49: #{tpu_custom_call.1} parent=39 // pred_check
          %p281 = pneg %p134
        $region50: #{tpu_custom_call.1} parent=39 // pred_check_branch
          %283 = sbr.rel (%p281) target = $region52
        $region51: #{tpu_custom_call.1} parent=39 // pred_region
          %284 = dma.done [#allocation7], 8192
        $region52: #{tpu_custom_call.1} parent=39 // pred_fallthru
          _
        %s285 = sand.u32 %s43, 1
        %s286 = scalar_lea.sflag [#allocation4], %s285
        %s287 = sand.u32 %s43, 1
        %s288 = smul.addr %s287, 8
        %s289 = scalar_lea.vmem [#allocation3], %s288
        %p290 = pneg %p56
        %p291 = pneg %p53
        %p292 = pneg %p82
        %p293 = pneg %p79
        %s294 = smul.u32 4, %s28
        %p295 = scmp.lt.s32.totalorder %s294, 3
        %s296 = scalar_select %p295, %s294, 3
        %s297 = scalar_lea.vmem %s2, %s296
        %p298 = pneg %p108
        %p299 = pneg %p105
        %p300 = pneg %p134
        %p301 = pneg %p131
        %p302 = pneg %p155
        %p303 = pneg %p152
        %p304 = pneg %p181
        %p305 = pneg %p178
        %s306 = sand.u32 %s168, 1
        %s307 = scalar_lea.sflag [#allocation5], %s306
        %s308 = sand.u32 %s168, 1
        %s309 = smul.addr %s308, 8
        %s310 = scalar_lea.vmem [#allocation9], %s309
        %s311 = smul.u32 4, %s28
        %s312 = smul.u32 4, %s28
        %p313 = scmp.lt.s32.totalorder %s312, 3
        %s314 = scalar_select %p313, %s312, 3
        %s315 = scalar_lea.vmem %s2, %s314
        %s316 = smul.u32 4, %s28
        %s317 = smul.u32 64, %s28
        %p318 = scmp.eq.s32.totalorder %s28, 0
        // Predicated region
        $region53: #{tpu_custom_call.1} parent=39 // pred_check
          %p319 = pneg %p318
        $region54: #{tpu_custom_call.1} parent=39 // pred_check_branch
          %321 = sbr.rel (%p319) target = $region56
        $region55: #{tpu_custom_call.1} parent=39 // pred_region
          %322 = vst [vmem:[#allocation2] sm:$0xff] 0.0
        $region56: #{tpu_custom_call.1} parent=39 // pred_fallthru
          _
        %v323 = vld [vmem:[%s272] sm:$0xff]
        %v324 = vld [vmem:[#allocation6] sm:$0xff]
        %v325 = vld [vmem:[#allocation6 + $0x8] sm:$0xff]
        %v326 = vld [vmem:[#allocation6 + $0x10] sm:$0xff]
        %v327 = vld [vmem:[#allocation6 + $0x18] sm:$0xff]
        %v328 = vld [vmem:[#allocation6 + $0x20] sm:$0xff]
        %v329 = vld [vmem:[#allocation6 + $0x28] sm:$0xff]
        %v330 = vld [vmem:[#allocation6 + $0x30] sm:$0xff]
        %v331 = vld [vmem:[#allocation6 + $0x38] sm:$0xff]
        %v332 = vld [vmem:[#allocation6 + $0x40] sm:$0xff]
        %v333 = vld [vmem:[#allocation6 + $0x48] sm:$0xff]
        %v334 = vld [vmem:[#allocation6 + $0x50] sm:$0xff]
        %v335 = vld [vmem:[#allocation6 + $0x58] sm:$0xff]
        %v336 = vld [vmem:[#allocation6 + $0x60] sm:$0xff]
        %v337 = vld [vmem:[#allocation6 + $0x68] sm:$0xff]
        %v338 = vld [vmem:[#allocation6 + $0x70] sm:$0xff]
        %v339 = vld [vmem:[#allocation6 + $0x78] sm:$0xff]
        %v340 = vld [vmem:[#allocation6 + $0x80] sm:$0xff]
        %v341 = vld [vmem:[#allocation6 + $0x88] sm:$0xff]
        %v342 = vld [vmem:[#allocation6 + $0x90] sm:$0xff]
        %v343 = vld [vmem:[#allocation6 + $0x98] sm:$0xff]
        %v344 = vld [vmem:[#allocation6 + $0xa0] sm:$0xff]
        %v345 = vld [vmem:[#allocation6 + $0xa8] sm:$0xff]
        %v346 = vld [vmem:[#allocation6 + $0xb0] sm:$0xff]
        %v347 = vld [vmem:[#allocation6 + $0xb8] sm:$0xff]
        %v348 = vld [vmem:[#allocation6 + $0xc0] sm:$0xff]
        %v349 = vld [vmem:[#allocation6 + $0xc8] sm:$0xff]
        %v350 = vld [vmem:[#allocation6 + $0xd0] sm:$0xff]
        %v351 = vld [vmem:[#allocation6 + $0xd8] sm:$0xff]
        %v352 = vld [vmem:[#allocation6 + $0xe0] sm:$0xff]
        %v353 = vld [vmem:[#allocation6 + $0xe8] sm:$0xff]
        %v354 = vld [vmem:[#allocation6 + $0xf0] sm:$0xff]
        %v355 = vld [vmem:[#allocation6 + $0xf8] sm:$0xff]
        %v356 = vld [vmem:[#allocation6 + $0x100] sm:$0xff]
        %v357 = vld [vmem:[#allocation6 + $0x108] sm:$0xff]
        %v358 = vld [vmem:[#allocation6 + $0x110] sm:$0xff]
        %v359 = vld [vmem:[#allocation6 + $0x118] sm:$0xff]
        %v360 = vld [vmem:[#allocation6 + $0x120] sm:$0xff]
        %v361 = vld [vmem:[#allocation6 + $0x128] sm:$0xff]
        %v362 = vld [vmem:[#allocation6 + $0x130] sm:$0xff]
        %v363 = vld [vmem:[#allocation6 + $0x138] sm:$0xff]
        %v364 = vld [vmem:[#allocation6 + $0x140] sm:$0xff]
        %v365 = vld [vmem:[#allocation6 + $0x148] sm:$0xff]
        %v366 = vld [vmem:[#allocation6 + $0x150] sm:$0xff]
        %v367 = vld [vmem:[#allocation6 + $0x158] sm:$0xff]
        %v368 = vld [vmem:[#allocation6 + $0x160] sm:$0xff]
        %v369 = vld [vmem:[#allocation6 + $0x168] sm:$0xff]
        %v370 = vld [vmem:[#allocation6 + $0x170] sm:$0xff]
        %v371 = vld [vmem:[#allocation6 + $0x178] sm:$0xff]
        %v372 = vld [vmem:[#allocation6 + $0x180] sm:$0xff]
        %v373 = vld [vmem:[#allocation6 + $0x188] sm:$0xff]
        %v374 = vld [vmem:[#allocation6 + $0x190] sm:$0xff]
        %v375 = vld [vmem:[#allocation6 + $0x198] sm:$0xff]
        %v376 = vld [vmem:[#allocation6 + $0x1a0] sm:$0xff]
        %v377 = vld [vmem:[#allocation6 + $0x1a8] sm:$0xff]
        %v378 = vld [vmem:[#allocation6 + $0x1b0] sm:$0xff]
        %v379 = vld [vmem:[#allocation6 + $0x1b8] sm:$0xff]
        %v380 = vld [vmem:[#allocation6 + $0x1c0] sm:$0xff]
        %v381 = vld [vmem:[#allocation6 + $0x1c8] sm:$0xff]
        %v382 = vld [vmem:[#allocation6 + $0x1d0] sm:$0xff]
        %v383 = vld [vmem:[#allocation6 + $0x1d8] sm:$0xff]
        %v384 = vld [vmem:[#allocation6 + $0x1e0] sm:$0xff]
        %v385 = vld [vmem:[#allocation6 + $0x1e8] sm:$0xff]
        %v386 = vld [vmem:[#allocation6 + $0x1f0] sm:$0xff]
        %v387 = vld [vmem:[#allocation6 + $0x1f8] sm:$0xff]
        %v388 = vld [vmem:[%s315] sm:$0xf]
        %v390 = vlaneseq
        %v391 = vshrl.u32 %v390, 7
        %v392 = vsub.s32 0, %v391
        %v393 = vrot.slane %v388, %v392
        %v394 = vlaneseq
        %v395 = vshrl.u32 %v394, 7
        %v396 = vsub.s32 1, %v395
        %v397 = vrot.slane %v388, %v396
        %v398 = vlaneseq
        %v399 = vshrl.u32 %v398, 7
        %v400 = vsub.s32 2, %v399
        %v401 = vrot.slane %v388, %v400
        %v402 = vlaneseq
        %v403 = vshrl.u32 %v402, 7
        %v404 = vsub.s32 3, %v403
        %v405 = vrot.slane %v388, %v404
        %410 = vmatprep.subr.mxu0 %v325
        %411 = vmatpush1.msra.mxu0 %v324
        %412 = vmatprep.subr.mxu0 %v329
        %413 = vmatpush1.msra.mxu0 %v328
        %414 = vmatprep.subr.mxu0 %v333
        %415 = vmatpush1.msra.mxu0 %v332
        %416 = vmatprep.subr.mxu0 %v337
        %417 = vmatpush1.msra.mxu0 %v336
        %418 = vmatprep.subr.mxu0 %v341
        %419 = vmatpush1.msra.mxu0 %v340
        %420 = vmatprep.subr.mxu0 %v345
        %421 = vmatpush1.msra.mxu0 %v344
        %422 = vmatprep.subr.mxu0 %v349
        %423 = vmatpush1.msra.mxu0 %v348
        %424 = vmatprep.subr.mxu0 %v353
        %425 = vmatpush1.msra.mxu0 %v352
        %426 = vmatprep.subr.mxu0 %v357
        %427 = vmatpush1.msra.mxu0 %v356
        %428 = vmatprep.subr.mxu0 %v361
        %429 = vmatpush1.msra.mxu0 %v360
        %430 = vmatprep.subr.mxu0 %v365
        %431 = vmatpush1.msra.mxu0 %v364
        %432 = vmatprep.subr.mxu0 %v369
        %433 = vmatpush1.msra.mxu0 %v368
        %434 = vmatprep.subr.mxu0 %v373
        %435 = vmatpush1.msra.mxu0 %v372
        %436 = vmatprep.subr.mxu0 %v377
        %437 = vmatpush1.msra.mxu0 %v376
        %438 = vmatprep.subr.mxu0 %v381
        %439 = vmatpush1.msra.mxu0 %v380
        %440 = vmatprep.subr.mxu0 %v385
        %441 = vmatpush1.msra.mxu0 %v384
        %442 = vmatprep.subr.mxu0 0.0
        %443 = vmatpush1.msra.mxu0 0.0
        %444 = vmatprep.subr.mxu0 0.0
        %445 = vmatpush1.msra.mxu0 0.0
        %446 = vmatprep.subr.mxu0 0.0
        %447 = vmatpush1.msra.mxu0 0.0
        %448 = vmatprep.subr.mxu0 0.0
        %449 = vmatpush1.msra.mxu0 0.0
        %450 = vmatprep.subr.mxu0 0.0
        %451 = vmatpush1.msra.mxu0 0.0
        %452 = vmatprep.subr.mxu0 0.0
        %453 = vmatpush1.msra.mxu0 0.0
        %454 = vmatprep.subr.mxu0 0.0
        %455 = vmatpush1.msra.mxu0 0.0
        %456 = vmatprep.subr.mxu0 0.0
        %457 = vmatpush1.msra.mxu0 0.0
        %458 = vmatprep.subr.mxu0 0.0
        %459 = vmatpush1.msra.mxu0 0.0
        %460 = vmatprep.subr.mxu0 0.0
        %461 = vmatpush1.msra.mxu0 0.0
        %462 = vmatprep.subr.mxu0 0.0
        %463 = vmatpush1.msra.mxu0 0.0
        %464 = vmatprep.subr.mxu0 0.0
        %465 = vmatpush1.msra.mxu0 0.0
        %466 = vmatprep.subr.mxu0 0.0
        %467 = vmatpush1.msra.mxu0 0.0
        %468 = vmatprep.subr.mxu0 0.0
        %469 = vmatpush1.msra.mxu0 0.0
        %470 = vmatprep.subr.mxu0 0.0
        %471 = vmatpush1.msra.mxu0 0.0
        %472 = vmatprep.subr.mxu0 0.0
        %473 = vmatpush1.msra.mxu0 0.0
        %474 = vmatprep.mubr.f32.mxu0 0.0
        %475 = vmatmul.mubr.f32.gmra.mrb[0].mxu0 %v323
        %v476 = vpop.f32.mrb[0].mxu0
        %v477 = vadd.f32 %v393, %v476
        %v478 = vpop.f32.mrb[0].mxu0
        %v479 = vadd.f32 %v397, %v478
        %480 = vdwg.mxu0
        %481 = vmatprep.subr.mxu0 %v327
        %482 = vmatpush1.msra.mxu0 %v326
        %483 = vmatprep.subr.mxu0 %v331
        %484 = vmatpush1.msra.mxu0 %v330
        %485 = vmatprep.subr.mxu0 %v335
        %486 = vmatpush1.msra.mxu0 %v334
        %487 = vmatprep.subr.mxu0 %v339
        %488 = vmatpush1.msra.mxu0 %v338
        %489 = vmatprep.subr.mxu0 %v343
        %490 = vmatpush1.msra.mxu0 %v342
        %491 = vmatprep.subr.mxu0 %v347
        %492 = vmatpush1.msra.mxu0 %v346
        %493 = vmatprep.subr.mxu0 %v351
        %494 = vmatpush1.msra.mxu0 %v350
        %495 = vmatprep.subr.mxu0 %v355
        %496 = vmatpush1.msra.mxu0 %v354
        %497 = vmatprep.subr.mxu0 %v359
        %498 = vmatpush1.msra.mxu0 %v358
        %499 = vmatprep.subr.mxu0 %v363
        %500 = vmatpush1.msra.mxu0 %v362
        %501 = vmatprep.subr.mxu0 %v367
        %502 = vmatpush1.msra.mxu0 %v366
        %503 = vmatprep.subr.mxu0 %v371
        %504 = vmatpush1.msra.mxu0 %v370
        %505 = vmatprep.subr.mxu0 %v375
        %506 = vmatpush1.msra.mxu0 %v374
        %507 = vmatprep.subr.mxu0 %v379
        %508 = vmatpush1.msra.mxu0 %v378
        %509 = vmatprep.subr.mxu0 %v383
        %510 = vmatpush1.msra.mxu0 %v382
        %511 = vmatprep.subr.mxu0 %v387
        %512 = vmatpush1.msra.mxu0 %v386
        %513 = vmatprep.subr.mxu0 0.0
        %514 = vmatpush1.msra.mxu0 0.0
        %515 = vmatprep.subr.mxu0 0.0
        %516 = vmatpush1.msra.mxu0 0.0
        %517 = vmatprep.subr.mxu0 0.0
        %518 = vmatpush1.msra.mxu0 0.0
        %519 = vmatprep.subr.mxu0 0.0
        %520 = vmatpush1.msra.mxu0 0.0
        %521 = vmatprep.subr.mxu0 0.0
        %522 = vmatpush1.msra.mxu0 0.0
        %523 = vmatprep.subr.mxu0 0.0
        %524 = vmatpush1.msra.mxu0 0.0
        %525 = vmatprep.subr.mxu0 0.0
        %526 = vmatpush1.msra.mxu0 0.0
        %527 = vmatprep.subr.mxu0 0.0
        %528 = vmatpush1.msra.mxu0 0.0
        %529 = vmatprep.subr.mxu0 0.0
        %530 = vmatpush1.msra.mxu0 0.0
        %531 = vmatprep.subr.mxu0 0.0
        %532 = vmatpush1.msra.mxu0 0.0
        %533 = vmatprep.subr.mxu0 0.0
        %534 = vmatpush1.msra.mxu0 0.0
        %535 = vmatprep.subr.mxu0 0.0
        %536 = vmatpush1.msra.mxu0 0.0
        %537 = vmatprep.subr.mxu0 0.0
        %538 = vmatpush1.msra.mxu0 0.0
        %539 = vmatprep.subr.mxu0 0.0
        %540 = vmatpush1.msra.mxu0 0.0
        %541 = vmatprep.subr.mxu0 0.0
        %542 = vmatpush1.msra.mxu0 0.0
        %543 = vmatprep.subr.mxu0 0.0
        %544 = vmatpush1.msra.mxu0 0.0
        %545 = vmatprep.mubr.f32.mxu0 0.0
        %546 = vmatmul.mubr.f32.gmra.mrb[0].mxu0 %v323
        %v547 = vpop.f32.mrb[0].mxu0
        %v548 = vadd.f32 %v401, %v547
        %v549 = vpop.f32.mrb[0].mxu0
        %v550 = vadd.f32 %v405, %v549
        %551 = vdwg.mxu0
        %v552 = vmul.f32 %v477, 0.7978846
        %v553 = vmul.f32 %v479, 0.7978846
        %v554 = vmul.f32 %v548, 0.7978846
        %v555 = vmul.f32 %v550, 0.7978846
        %v556 = vmul.f32 %v477, 0.044715
        %v557 = vmul.f32 %v479, 0.044715
        %v558 = vmul.f32 %v548, 0.044715
        %v559 = vmul.f32 %v550, 0.044715
        %v560 = vmul.f32 %v556, %v477
        %v561 = vmul.f32 %v557, %v479
        %v562 = vmul.f32 %v558, %v548
        %v563 = vmul.f32 %v559, %v550
        %v564 = vadd.f32 %v560, 1.0
        %v565 = vadd.f32 %v561, 1.0
        %v566 = vadd.f32 %v562, 1.0
        %v567 = vadd.f32 %v563, 1.0
        %v568 = vmul.f32 %v552, %v564
        %v569 = vmul.f32 %v553, %v565
        %v570 = vmul.f32 %v554, %v566
        %v571 = vmul.f32 %v555, %v567
        %v572 = vmul.f32 %v477, 0.5
        %v573 = vmul.f32 %v479, 0.5
        %v574 = vmul.f32 %v548, 0.5
        %v575 = vmul.f32 %v550, 0.5
        %v576 = vtanh.pop %v568
        %v577 = vtanh.pop %v569
        %v578 = vtanh.pop %v570
        %v579 = vtanh.pop %v571
        %v580 = vadd.f32 %v576, 1.0
        %v581 = vadd.f32 %v577, 1.0
        %v582 = vadd.f32 %v578, 1.0
        %v583 = vadd.f32 %v579, 1.0
        %v584 = vmul.f32 %v572, %v580
        %v585 = vmul.f32 %v573, %v581
        %v586 = vmul.f32 %v574, %v582
        %v587 = vmul.f32 %v575, %v583
        %v588 = vld [vmem:[#allocation2] sm:$0xff]
        %v589 = vld [vmem:[#allocation8] sm:$0xff]
        %v590 = vld [vmem:[#allocation8 + $0x8] sm:$0xff]
        %v591 = vld [vmem:[#allocation8 + $0x10] sm:$0xff]
        %v592 = vld [vmem:[#allocation8 + $0x18] sm:$0xff]
        %v593 = vld [vmem:[#allocation8 + $0x20] sm:$0xff]
        %v594 = vld [vmem:[#allocation8 + $0x28] sm:$0xff]
        %v595 = vld [vmem:[#allocation8 + $0x30] sm:$0xff]
        %v596 = vld [vmem:[#allocation8 + $0x38] sm:$0xff]
        %v597 = vld [vmem:[#allocation8 + $0x40] sm:$0xff]
        %v598 = vld [vmem:[#allocation8 + $0x48] sm:$0xff]
        %v599 = vld [vmem:[#allocation8 + $0x50] sm:$0xff]
        %v600 = vld [vmem:[#allocation8 + $0x58] sm:$0xff]
        %v601 = vld [vmem:[#allocation8 + $0x60] sm:$0xff]
        %v602 = vld [vmem:[#allocation8 + $0x68] sm:$0xff]
        %v603 = vld [vmem:[#allocation8 + $0x70] sm:$0xff]
        %v604 = vld [vmem:[#allocation8 + $0x78] sm:$0xff]
        %v605 = vld [vmem:[#allocation8 + $0x80] sm:$0xff]
        %v606 = vld [vmem:[#allocation8 + $0x88] sm:$0xff]
        %v607 = vld [vmem:[#allocation8 + $0x90] sm:$0xff]
        %v608 = vld [vmem:[#allocation8 + $0x98] sm:$0xff]
        %v609 = vld [vmem:[#allocation8 + $0xa0] sm:$0xff]
        %v610 = vld [vmem:[#allocation8 + $0xa8] sm:$0xff]
        %v611 = vld [vmem:[#allocation8 + $0xb0] sm:$0xff]
        %v612 = vld [vmem:[#allocation8 + $0xb8] sm:$0xff]
        %v613 = vld [vmem:[#allocation8 + $0xc0] sm:$0xff]
        %v614 = vld [vmem:[#allocation8 + $0xc8] sm:$0xff]
        %v615 = vld [vmem:[#allocation8 + $0xd0] sm:$0xff]
        %v616 = vld [vmem:[#allocation8 + $0xd8] sm:$0xff]
        %v617 = vld [vmem:[#allocation8 + $0xe0] sm:$0xff]
        %v618 = vld [vmem:[#allocation8 + $0xe8] sm:$0xff]
        %v619 = vld [vmem:[#allocation8 + $0xf0] sm:$0xff]
        %v620 = vld [vmem:[#allocation8 + $0xf8] sm:$0xff]
        %v621 = vld [vmem:[#allocation8 + $0x100] sm:$0xff]
        %v622 = vld [vmem:[#allocation8 + $0x108] sm:$0xff]
        %v623 = vld [vmem:[#allocation8 + $0x110] sm:$0xff]
        %v624 = vld [vmem:[#allocation8 + $0x118] sm:$0xff]
        %v625 = vld [vmem:[#allocation8 + $0x120] sm:$0xff]
        %v626 = vld [vmem:[#allocation8 + $0x128] sm:$0xff]
        %v627 = vld [vmem:[#allocation8 + $0x130] sm:$0xff]
        %v628 = vld [vmem:[#allocation8 + $0x138] sm:$0xff]
        %v629 = vld [vmem:[#allocation8 + $0x140] sm:$0xff]
        %v630 = vld [vmem:[#allocation8 + $0x148] sm:$0xff]
        %v631 = vld [vmem:[#allocation8 + $0x150] sm:$0xff]
        %v632 = vld [vmem:[#allocation8 + $0x158] sm:$0xff]
        %v633 = vld [vmem:[#allocation8 + $0x160] sm:$0xff]
        %v634 = vld [vmem:[#allocation8 + $0x168] sm:$0xff]
        %v635 = vld [vmem:[#allocation8 + $0x170] sm:$0xff]
        %v636 = vld [vmem:[#allocation8 + $0x178] sm:$0xff]
        %v637 = vld [vmem:[#allocation8 + $0x180] sm:$0xff]
        %v638 = vld [vmem:[#allocation8 + $0x188] sm:$0xff]
        %v639 = vld [vmem:[#allocation8 + $0x190] sm:$0xff]
        %v640 = vld [vmem:[#allocation8 + $0x198] sm:$0xff]
        %v641 = vld [vmem:[#allocation8 + $0x1a0] sm:$0xff]
        %v642 = vld [vmem:[#allocation8 + $0x1a8] sm:$0xff]
        %v643 = vld [vmem:[#allocation8 + $0x1b0] sm:$0xff]
        %v644 = vld [vmem:[#allocation8 + $0x1b8] sm:$0xff]
        %v645 = vld [vmem:[#allocation8 + $0x1c0] sm:$0xff]
        %v646 = vld [vmem:[#allocation8 + $0x1c8] sm:$0xff]
        %v647 = vld [vmem:[#allocation8 + $0x1d0] sm:$0xff]
        %v648 = vld [vmem:[#allocation8 + $0x1d8] sm:$0xff]
        %v649 = vld [vmem:[#allocation8 + $0x1e0] sm:$0xff]
        %v650 = vld [vmem:[#allocation8 + $0x1e8] sm:$0xff]
        %v651 = vld [vmem:[#allocation8 + $0x1f0] sm:$0xff]
        %v652 = vld [vmem:[#allocation8 + $0x1f8] sm:$0xff]
        %653 = vmatprep.subr.mxu0 0.0
        %654 = vmatpush1.msra.mxu0 %v589
        %655 = vmatprep.subr.mxu0 0.0
        %656 = vmatpush1.msra.mxu0 %v590
        %657 = vmatprep.subr.mxu0 0.0
        %658 = vmatpush1.msra.mxu0 %v591
        %659 = vmatprep.subr.mxu0 0.0
        %660 = vmatpush1.msra.mxu0 %v592
        %661 = vmatprep.subr.mxu0 0.0
        %662 = vmatpush1.msra.mxu0 %v593
        %663 = vmatprep.subr.mxu0 0.0
        %664 = vmatpush1.msra.mxu0 %v594
        %665 = vmatprep.subr.mxu0 0.0
        %666 = vmatpush1.msra.mxu0 %v595
        %667 = vmatprep.subr.mxu0 0.0
        %668 = vmatpush1.msra.mxu0 %v596
        %669 = vmatprep.subr.mxu0 0.0
        %670 = vmatpush1.msra.mxu0 %v597
        %671 = vmatprep.subr.mxu0 0.0
        %672 = vmatpush1.msra.mxu0 %v598
        %673 = vmatprep.subr.mxu0 0.0
        %674 = vmatpush1.msra.mxu0 %v599
        %675 = vmatprep.subr.mxu0 0.0
        %676 = vmatpush1.msra.mxu0 %v600
        %677 = vmatprep.subr.mxu0 0.0
        %678 = vmatpush1.msra.mxu0 %v601
        %679 = vmatprep.subr.mxu0 0.0
        %680 = vmatpush1.msra.mxu0 %v602
        %681 = vmatprep.subr.mxu0 0.0
        %682 = vmatpush1.msra.mxu0 %v603
        %683 = vmatprep.subr.mxu0 0.0
        %684 = vmatpush1.msra.mxu0 %v604
        %685 = vmatprep.subr.mxu0 0.0
        %686 = vmatpush1.msra.mxu0 %v605
        %687 = vmatprep.subr.mxu0 0.0
        %688 = vmatpush1.msra.mxu0 %v606
        %689 = vmatprep.subr.mxu0 0.0
        %690 = vmatpush1.msra.mxu0 %v607
        %691 = vmatprep.subr.mxu0 0.0
        %692 = vmatpush1.msra.mxu0 %v608
        %693 = vmatprep.subr.mxu0 0.0
        %694 = vmatpush1.msra.mxu0 %v609
        %695 = vmatprep.subr.mxu0 0.0
        %696 = vmatpush1.msra.mxu0 %v610
        %697 = vmatprep.subr.mxu0 0.0
        %698 = vmatpush1.msra.mxu0 %v611
        %699 = vmatprep.subr.mxu0 0.0
        %700 = vmatpush1.msra.mxu0 %v612
        %701 = vmatprep.subr.mxu0 0.0
        %702 = vmatpush1.msra.mxu0 %v613
        %703 = vmatprep.subr.mxu0 0.0
        %704 = vmatpush1.msra.mxu0 %v614
        %705 = vmatprep.subr.mxu0 0.0
        %706 = vmatpush1.msra.mxu0 %v615
        %707 = vmatprep.subr.mxu0 0.0
        %708 = vmatpush1.msra.mxu0 %v616
        %709 = vmatprep.subr.mxu0 0.0
        %710 = vmatpush1.msra.mxu0 %v617
        %711 = vmatprep.subr.mxu0 0.0
        %712 = vmatpush1.msra.mxu0 %v618
        %713 = vmatprep.subr.mxu0 0.0
        %714 = vmatpush1.msra.mxu0 %v619
        %715 = vmatprep.subr.mxu0 0.0
        %716 = vmatpush1.msra.mxu0 %v620
        %717 = vmatprep.mubr.f32.mxu0 %v585
        %718 = vmatmul.mubr.f32.gmra.mrb[0].mxu0 %v584
        %v719 = vpop.f32.mrb[0].mxu0
        %v720 = vadd.f32 0.0, %v719
        %v721 = vpop.f32.mrb[0].mxu0
        %722 = vdwg.mxu0
        %723 = vmatprep.subr.mxu0 0.0
        %724 = vmatpush1.msra.mxu0 %v621
        %725 = vmatprep.subr.mxu0 0.0
        %726 = vmatpush1.msra.mxu0 %v622
        %727 = vmatprep.subr.mxu0 0.0
        %728 = vmatpush1.msra.mxu0 %v623
        %729 = vmatprep.subr.mxu0 0.0
        %730 = vmatpush1.msra.mxu0 %v624
        %731 = vmatprep.subr.mxu0 0.0
        %732 = vmatpush1.msra.mxu0 %v625
        %733 = vmatprep.subr.mxu0 0.0
        %734 = vmatpush1.msra.mxu0 %v626
        %735 = vmatprep.subr.mxu0 0.0
        %736 = vmatpush1.msra.mxu0 %v627
        %737 = vmatprep.subr.mxu0 0.0
        %738 = vmatpush1.msra.mxu0 %v628
        %739 = vmatprep.subr.mxu0 0.0
        %740 = vmatpush1.msra.mxu0 %v629
        %741 = vmatprep.subr.mxu0 0.0
        %742 = vmatpush1.msra.mxu0 %v630
        %743 = vmatprep.subr.mxu0 0.0
        %744 = vmatpush1.msra.mxu0 %v631
        %745 = vmatprep.subr.mxu0 0.0
        %746 = vmatpush1.msra.mxu0 %v632
        %747 = vmatprep.subr.mxu0 0.0
        %748 = vmatpush1.msra.mxu0 %v633
        %749 = vmatprep.subr.mxu0 0.0
        %750 = vmatpush1.msra.mxu0 %v634
        %751 = vmatprep.subr.mxu0 0.0
        %752 = vmatpush1.msra.mxu0 %v635
        %753 = vmatprep.subr.mxu0 0.0
        %754 = vmatpush1.msra.mxu0 %v636
        %755 = vmatprep.subr.mxu0 0.0
        %756 = vmatpush1.msra.mxu0 %v637
        %757 = vmatprep.subr.mxu0 0.0
        %758 = vmatpush1.msra.mxu0 %v638
        %759 = vmatprep.subr.mxu0 0.0
        %760 = vmatpush1.msra.mxu0 %v639
        %761 = vmatprep.subr.mxu0 0.0
        %762 = vmatpush1.msra.mxu0 %v640
        %763 = vmatprep.subr.mxu0 0.0
        %764 = vmatpush1.msra.mxu0 %v641
        %765 = vmatprep.subr.mxu0 0.0
        %766 = vmatpush1.msra.mxu0 %v642
        %767 = vmatprep.subr.mxu0 0.0
        %768 = vmatpush1.msra.mxu0 %v643
        %769 = vmatprep.subr.mxu0 0.0
        %770 = vmatpush1.msra.mxu0 %v644
        %771 = vmatprep.subr.mxu0 0.0
        %772 = vmatpush1.msra.mxu0 %v645
        %773 = vmatprep.subr.mxu0 0.0
        %774 = vmatpush1.msra.mxu0 %v646
        %775 = vmatprep.subr.mxu0 0.0
        %776 = vmatpush1.msra.mxu0 %v647
        %777 = vmatprep.subr.mxu0 0.0
        %778 = vmatpush1.msra.mxu0 %v648
        %779 = vmatprep.subr.mxu0 0.0
        %780 = vmatpush1.msra.mxu0 %v649
        %781 = vmatprep.subr.mxu0 0.0
        %782 = vmatpush1.msra.mxu0 %v650
        %783 = vmatprep.subr.mxu0 0.0
        %784 = vmatpush1.msra.mxu0 %v651
        %785 = vmatprep.subr.mxu0 0.0
        %786 = vmatpush1.msra.mxu0 %v652
        %787 = vmatprep.mubr.f32.mxu0 %v587
        %788 = vmatmul.mubr.f32.gmra.mrb[0].mxu0 %v586
        %v789 = vpop.f32.mrb[0].mxu0
        %v790 = vadd.f32 %v720, %v789
        %v791 = vpop.f32.mrb[0].mxu0
        %792 = vdwg.mxu0
        %v793 = vadd.f32 %v588, %v790
        %794 = vst [vmem:[#allocation2] sm:$0xff] %v793
        // Predicated region
        $region57: #{tpu_custom_call.1} parent=39 // pred_check
          %p795 = pneg %p318
        $region58: #{tpu_custom_call.1} parent=39 // pred_check_branch
          %797 = sbr.rel (%p795) target = $region60
        $region59: #{tpu_custom_call.1} parent=39 // pred_region
          %v798 = vld [vmem:[#allocation2] sm:$0xff]
          %v799 = vld [vmem:[%s4] sm:$0x1]
          %v801 = vlaneseq
          %v802 = vshrl.u32 %v801, 7
          %v803 = vsub.s32 0, %v802
          %v804 = vrot.slane %v799, %v803
          %v806 = vadd.f32 %v798, %v804
          %807 = vst [vmem:[%s310] sm:$0xff] %v806
        $region60: #{tpu_custom_call.1} parent=39 // pred_fallthru
          _
        %s808 = sand.u32 %s168, 1
        %s809 = scalar_lea.sflag [#allocation5], %s808
        %s810 = sand.u32 %s168, 1
        %s811 = smul.addr %s810, 8
        %s812 = scalar_lea.vmem [#allocation9], %s811
        // Predicated region
        $region61: #{tpu_custom_call.1} parent=39 // pred_check
          %p813 = pneg %p178
        $region62: #{tpu_custom_call.1} parent=39 // pred_check_branch
          %815 = sbr.rel (%p813) target = $region64
        $region63: #{tpu_custom_call.1} parent=39 // pred_region
          %s817 = ssub.s32 128, 128
          %818 = vsyncadd %s809, %s817
          %s819 = smul.addr %s27, 128
          %s820 = scalar_lea.hbm %s5, %s819
          %s822 = sshll.u32 %s812, 4
          %s823 = int_to_ptr.vmem [resolvable:$true] %s822
          %825 = dma.vmem_to_hbm [thread:$0]  %s823, 128, %s820, %s809
        $region64: #{tpu_custom_call.1} parent=39 // pred_fallthru
          _
      $region40: #{tpu_custom_call.1} parent=5 // pred_fallthru
        _
      %p826 = scmp.le.s32.totalorder 2, %s18
      // Predicated region
      $region65: #{tpu_custom_call.1} parent=5 // pred_check
        %p827 = pneg %p826
      $region66: #{tpu_custom_call.1} parent=5 // pred_check_branch
        %829 = sbr.rel (%p827) target = $region68
      $region67: #{tpu_custom_call.1} parent=5 // pred_region
        %s830 = ssub.s32 %s18, 2
        // Predicated region
        $region69: #{tpu_custom_call.1} parent=67 // pred_check
          %p831 = pneg %p184
        $region70: #{tpu_custom_call.1} parent=67 // pred_check_branch
          %833 = sbr.rel (%p831) target = $region72
        $region71: #{tpu_custom_call.1} parent=67 // pred_region
          %s834 = sand.u32 %s169, 1
          %s835 = scalar_lea.sflag [#allocation5], %s834
          %s836 = sand.u32 %s169, 1
          %s837 = smul.addr %s836, 8
          %s838 = scalar_lea.vmem [#allocation9], %s837
          %839 = dma.done %s835, 128
        $region72: #{tpu_custom_call.1} parent=67 // pred_fallthru
          _
      $region68: #{tpu_custom_call.1} parent=5 // pred_fallthru
        _
    $region6: #{tpu_custom_call.1} parent=1 // loop_footer
      %s22 = sadd.s32 1, %s18
    $region7: #{tpu_custom_call.1} parent=1 // loop_footer_branch
      %17 = sbr.rel target = $region3
    $region8: #{tpu_custom_call.1} parent=1 // loop_exit
      _
    %840 = vsyncpa [#allocation4], 1
    %s841 = scalar_lea.sflag [#allocation4], 1
    %842 = vsyncpa %s841, 1
    %843 = vsyncpa [#allocation7], 1
    %844 = vsyncpa [#allocation5], 1
    %s845 = scalar_lea.sflag [#allocation5], 1
    %846 = vsyncpa %s845, 1

// kernel: tpu_custom_call.1
$region0: #{tpu_custom_call.1}
  #allocation0 [shape = 'u32[]', space=smem, size = 0x4, offset = 0x4, fixed_abs, tag = 'smem constant byte address 0x4 - core index']
  #allocation1 [shape = 'u32[144,128]{1,0:T(1,128)}', space=vmem, size = 0x12000, scoped, tag = 'internal scratch']
  #allocation2 [shape = 'f32[8,128]{1,0:T(8,128)}', space=vmem, size = 0x1000, scoped, tag = 'scratch operand']
  %s0 = inlined_call_operand.hbm [shape: f32[16,128], index: 0, kind: input, shape index: {}]
  %s1 = inlined_call_operand.hbm [shape: f32[128,512], index: 1, kind: input, shape index: {}]
  %s2 = inlined_call_operand.vmem [shape: f32[1,512], index: 2, kind: input, shape index: {}]
  %s3 = inlined_call_operand.hbm [shape: f32[512,128], index: 3, kind: input, shape index: {}]
  %s4 = inlined_call_operand.vmem [shape: f32[1,128], index: 4, kind: input, shape index: {}]
  %s5 = inlined_call_operand.hbm [shape: f32[16,128], index: 5, kind: output, shape index: {}]
  %s6 = sld [smem:[#allocation0]]
  $region73: #{tpu_custom_call.1} parent=0
    _
  %s8 = ssub.s32 1, %s6
  %s9 = scalar_select 0, %s8, %s6
  $region1: #{tpu_custom_call.1} parent=0
    #allocation3 [shape = 'u8[8192]{0}', space=vmem, size = 0x2000, scoped, tag = 'input window, operand 0']
    #allocation4 [shape = 's32[2]{0}', space=sflag, size = 0x8, scoped, tag = 'scoped memory for tpu_custom_call.1']
    #allocation5 [shape = 's32[2]{0}', space=sflag, size = 0x8, scoped, tag = 'scoped memory for tpu_custom_call.1']
    #allocation6 [shape = 'u8[262144]{0}', space=vmem, size = 0x40000, scoped, tag = 'input window, operand 1, single buffered']
    #allocation7 [shape = 's32[1]{0}', space=sflag, size = 0x4, scoped, tag = 'scoped memory for tpu_custom_call.1']
    #allocation8 [shape = 'u8[262144]{0}', space=vmem, size = 0x40000, scoped, tag = 'input window, operand 3, single buffered']
    #allocation9 [shape = 'u8[8192]{0}', space=vmem, size = 0x2000, scoped, tag = 'output window, operand 0']
    %10 = vsyncpa [#allocation4], 0
    %s11 = scalar_lea.sflag [#allocation4], 1
    %12 = vsyncpa %s11, 0
    %13 = vsyncpa [#allocation7], 0
    %14 = vsyncpa [#allocation5], 0
    %s15 = scalar_lea.sflag [#allocation5], 1
    %16 = vsyncpa %s15, 0
    loop: start=0, step=1, limit=4
    $region2: #{tpu_custom_call.1} parent=1 // loop_pre_header
      _
    $region3: #{tpu_custom_call.1} parent=1 // loop_header
      %s18 = sphi 0, %s22
      %p19 = scmp.ge.s32.totalorder %s18, 4
      %s25 = sphi 0, %s37
      %s26 = sphi 0, %s33
      %s27 = sphi 0, %s25
      %s28 = sphi 0, %s26
      %s29 = sphi 0, %s27
      %s30 = sphi 0, %s28
      %s40 = sphi 0, %s42
      %s43 = sphi 0, %s40
      %s44 = sphi 0, %s43
      %s60 = sphi 0, %s44
      %s66 = sphi 0, %s68
      %s69 = sphi 0, %s66
      %s70 = sphi 0, %s69
      %s86 = sphi 0, %s70
      %s92 = sphi 0, %s94
      %s95 = sphi 0, %s92
      %s96 = sphi 0, %s95
      %s112 = sphi 0, %s96
      %s118 = sphi 0, %s120
      %s121 = sphi 0, %s118
      %s122 = sphi 0, %s121
      %s138 = sphi 0, %s122
      %s142 = sphi 0, %s142
      %s144 = sphi 0, %s142
      %s145 = sphi 0, %s144
      %s159 = sphi 0, %s145
      %s165 = sphi 0, %s167
      %s168 = sphi 0, %s165
      %s169 = sphi 0, %s168
      %s185 = sphi 0, %s169
    $region4: #{tpu_custom_call.1} parent=1 // loop_header_branch
      %21 = sbr.rel (%p19) target = $region8
    $region5: #{tpu_custom_call.1} parent=1 // loop_body
      %s23 = ssub.s32 %s18, 1
      %s24 = ssub.s32 %s18, 2
      %s31 = sadd.s32 1, %s26
      %p32 = scmp.ge.s32.totalorder %s31, 1
      %s33 = scalar_select %p32, 0, %s31
      %s34 = sadd.s32 1, %s25
      %s35 = scalar_select %p32, %s34, %s25
      %p36 = scmp.ge.s32.totalorder %s35, 2
      %s37 = scalar_select %p36, 0, %s35
      %s38 = ssub.s32 %s25, %s37
      %p39 = scmp.eq.s32.totalorder %s38, 0
      %s41 = sadd.s32 %s40, 1
      %s42 = scalar_select %p39, %s40, %s41
      %p45 = pneg %p39
      %p46 = scmp.eq.s32.totalorder %s18, 1
      %p47 = por %p45, %p46
      %p48 = scmp.ne.s32.totalorder %s40, %s43
      %p49 = scmp.eq.s32.totalorder %s18, 0
      %p50 = por %p48, %p49
      %p51 = scmp.ne.s32.totalorder %s40, %s43
      %p52 = scmp.eq.s32.totalorder %s23, 1
      %p53 = por %p51, %p52
      %p54 = scmp.ne.s32.totalorder %s43, %s44
      %p55 = scmp.eq.s32.totalorder %s23, 0
      %p56 = por %p54, %p55
      %p57 = scmp.ne.s32.totalorder %s43, %s44
      %p58 = scmp.eq.s32.totalorder %s24, 1
      %p59 = por %p57, %p58
      %p61 = scmp.ne.s32.totalorder %s44, %s60
      %p62 = scmp.eq.s32.totalorder %s24, 0
      %p63 = por %p61, %p62
      %s64 = ssub.s32 %s26, %s33
      %p65 = scmp.eq.s32.totalorder %s64, 0
      %s67 = sadd.s32 %s66, 1
      %s68 = scalar_select %p65, %s66, %s67
      %p71 = pneg %p65
      %p72 = scmp.eq.s32.totalorder %s18, 1
      %p73 = por %p71, %p72
      %p74 = scmp.ne.s32.totalorder %s66, %s69
      %p75 = scmp.eq.s32.totalorder %s18, 0
      %p76 = por %p74, %p75
      %p77 = scmp.ne.s32.totalorder %s66, %s69
      %p78 = scmp.eq.s32.totalorder %s23, 1
      %p79 = por %p77, %p78
      %p80 = scmp.ne.s32.totalorder %s69, %s70
      %p81 = scmp.eq.s32.totalorder %s23, 0
      %p82 = por %p80, %p81
      %p83 = scmp.ne.s32.totalorder %s69, %s70
      %p84 = scmp.eq.s32.totalorder %s24, 1
      %p85 = por %p83, %p84
      %p87 = scmp.ne.s32.totalorder %s70, %s86
      %p88 = scmp.eq.s32.totalorder %s24, 0
      %p89 = por %p87, %p88
      %s90 = ssub.s32 %s26, %s33
      %p91 = scmp.eq.s32.totalorder %s90, 0
      %s93 = sadd.s32 %s92, 1
      %s94 = scalar_select %p91, %s92, %s93
      %p97 = pneg %p91
      %p98 = scmp.eq.s32.totalorder %s18, 1
      %p99 = por %p97, %p98
      %p100 = scmp.ne.s32.totalorder %s92, %s95
      %p101 = scmp.eq.s32.totalorder %s18, 0
      %p102 = por %p100, %p101
      %p103 = scmp.ne.s32.totalorder %s92, %s95
      %p104 = scmp.eq.s32.totalorder %s23, 1
      %p105 = por %p103, %p104
      %p106 = scmp.ne.s32.totalorder %s95, %s96
      %p107 = scmp.eq.s32.totalorder %s23, 0
      %p108 = por %p106, %p107
      %p109 = scmp.ne.s32.totalorder %s95, %s96
      %p110 = scmp.eq.s32.totalorder %s24, 1
      %p111 = por %p109, %p110
      %p113 = scmp.ne.s32.totalorder %s96, %s112
      %p114 = scmp.eq.s32.totalorder %s24, 0
      %p115 = por %p113, %p114
      %s116 = ssub.s32 %s26, %s33
      %p117 = scmp.eq.s32.totalorder %s116, 0
      %s119 = sadd.s32 %s118, 1
      %s120 = scalar_select %p117, %s118, %s119
      %p123 = pneg %p117
      %p124 = scmp.eq.s32.totalorder %s18, 1
      %p125 = por %p123, %p124
      %p126 = scmp.ne.s32.totalorder %s118, %s121
      %p127 = scmp.eq.s32.totalorder %s18, 0
      %p128 = por %p126, %p127
      %p129 = scmp.ne.s32.totalorder %s118, %s121
      %p130 = scmp.eq.s32.totalorder %s23, 1
      %p131 = por %p129, %p130
      %p132 = scmp.ne.s32.totalorder %s121, %s122
      %p133 = scmp.eq.s32.totalorder %s23, 0
      %p134 = por %p132, %p133
      %p135 = scmp.ne.s32.totalorder %s121, %s122
      %p136 = scmp.eq.s32.totalorder %s24, 1
      %p137 = por %p135, %p136
      %p139 = scmp.ne.s32.totalorder %s122, %s138
      %p140 = scmp.eq.s32.totalorder %s24, 0
      %p141 = por %p139, %p140
      %s143 = sadd.s32 %s142, 1
      %p146 = scmp.eq.s32.totalorder %s18, 1
      %p147 = scmp.ne.s32.totalorder %s142, %s144
      %p148 = scmp.eq.s32.totalorder %s18, 0
      %p149 = por %p147, %p148
      %p150 = scmp.ne.s32.totalorder %s142, %s144
      %p151 = scmp.eq.s32.totalorder %s23, 1
      %p152 = por %p150, %p151
      %p153 = scmp.ne.s32.totalorder %s144, %s145
      %p154 = scmp.eq.s32.totalorder %s23, 0
      %p155 = por %p153, %p154
      %p156 = scmp.ne.s32.totalorder %s144, %s145
      %p157 = scmp.eq.s32.totalorder %s24, 1
      %p158 = por %p156, %p157
      %p160 = scmp.ne.s32.totalorder %s145, %s159
      %p161 = scmp.eq.s32.totalorder %s24, 0
      %p162 = por %p160, %p161
      %s163 = ssub.s32 %s25, %s37
      %p164 = scmp.eq.s32.totalorder %s163, 0
      %s166 = sadd.s32 %s165, 1
      %s167 = scalar_select %p164, %s165, %s166
      %p170 = pneg %p164
      %p171 = scmp.eq.s32.totalorder %s18, 1
      %p172 = por %p170, %p171
      %p173 = scmp.ne.s32.totalorder %s165, %s168
      %p174 = scmp.eq.s32.totalorder %s18, 0
      %p175 = por %p173, %p174
      %p176 = scmp.ne.s32.totalorder %s165, %s168
      %p177 = scmp.eq.s32.totalorder %s23, 1
      %p178 = por %p176, %p177
      %p179 = scmp.ne.s32.totalorder %s168, %s169
      %p180 = scmp.eq.s32.totalorder %s23, 0
      %p181 = por %p179, %p180
      %p182 = scmp.ne.s32.totalorder %s168, %s169
      %p183 = scmp.eq.s32.totalorder %s24, 1
      %p184 = por %p182, %p183
      %p186 = scmp.ne.s32.totalorder %s169, %s185
      %p187 = scmp.eq.s32.totalorder %s24, 0
      %p188 = por %p186, %p187
      %p189 = scmp.le.s32.totalorder 1, %s18
      %p190 = scmp.lt.s32.totalorder %s18, 3
      %p191 = pnand %p189, %p190
      %p192 = pneg %p191
      // Predicated region
      $region9: #{tpu_custom_call.1} parent=5 // pred_check
        _
      $region10: #{tpu_custom_call.1} parent=5 // pred_check_branch
        %194 = sbr.rel (%p191) target = $region12
      $region11: #{tpu_custom_call.1} parent=5 // pred_region
        %s195 = ssub.s32 %s18, 1
        // Predicated region
        $region13: #{tpu_custom_call.1} parent=11 // pred_check
          %p196 = pneg %p82
        $region14: #{tpu_custom_call.1} parent=11 // pred_check_branch
          %198 = sbr.rel (%p196) target = $region16
        $region15: #{tpu_custom_call.1} parent=11 // pred_region
          %s199 = smul.u32 4, %s28
          %s201 = ssub.s32 8192, 8192
          %202 = vsyncadd [#allocation7], %s201
          %s203 = smul.addr %s199, 128
          %s204 = scalar_lea.hbm %s1, %s203
          %s205 = sshll.u32 [#allocation6], 4
          %s206 = int_to_ptr.vmem [resolvable:$true] %s205
          %211 = dma.hbm_to_vmem [thread:$0]  %s204, 8192, %s206, [#allocation7], 512, 512, 32
        $region16: #{tpu_custom_call.1} parent=11 // pred_fallthru
          _
        // Predicated region
        $region17: #{tpu_custom_call.1} parent=11 // pred_check
          %p212 = pneg %p108
        $region18: #{tpu_custom_call.1} parent=11 // pred_check_branch
          %214 = sbr.rel (%p212) target = $region20
        $region19: #{tpu_custom_call.1} parent=11 // pred_region
          %s215 = smul.u32 4, %s28
          %p216 = scmp.lt.s32.totalorder %s215, 3
          %s217 = scalar_select %p216, %s215, 3
          %s218 = scalar_lea.vmem %s2, %s217
          %s219 = smul.u32 4, %s28
        $region20: #{tpu_custom_call.1} parent=11 // pred_fallthru
          _
        // Predicated region
        $region21: #{tpu_custom_call.1} parent=11 // pred_check
          %p220 = pneg %p134
        $region22: #{tpu_custom_call.1} parent=11 // pred_check_branch
          %222 = sbr.rel (%p220) target = $region24
        $region23: #{tpu_custom_call.1} parent=11 // pred_region
          %s223 = smul.u32 64, %s28
          %s225 = ssub.s32 8192, 8192
          %226 = vsyncadd [#allocation7], %s225
          %s227 = smul.addr %s223, 128
          %s228 = scalar_lea.hbm %s3, %s227
          %s229 = sshll.u32 [#allocation8], 4
          %s230 = int_to_ptr.vmem [resolvable:$true] %s229
          %235 = dma.hbm_to_vmem [thread:$0]  %s228, 8192, %s230, [#allocation7], 128, 128, 8
        $region24: #{tpu_custom_call.1} parent=11 // pred_fallthru
          _
        // Predicated region
        $region25: #{tpu_custom_call.1} parent=11 // pred_check
          %p236 = pneg %p155
        $region26: #{tpu_custom_call.1} parent=11 // pred_check_branch
          %238 = sbr.rel (%p236) target = $region28
        $region27: #{tpu_custom_call.1} parent=11 // pred_region
          _
        $region28: #{tpu_custom_call.1} parent=11 // pred_fallthru
          _
      $region12: #{tpu_custom_call.1} parent=5 // pred_fallthru
        _
      %p239 = scmp.lt.s32.totalorder %s18, 2
      // Predicated region
      $region29: #{tpu_custom_call.1} parent=5 // pred_check
        %p240 = pneg %p239
      $region30: #{tpu_custom_call.1} parent=5 // pred_check_branch
        %242 = sbr.rel (%p240) target = $region32
      $region31: #{tpu_custom_call.1} parent=5 // pred_region
        // Predicated region
        $region33: #{tpu_custom_call.1} parent=31 // pred_check
          %p243 = pneg %p50
        $region34: #{tpu_custom_call.1} parent=31 // pred_check_branch
          %245 = sbr.rel (%p243) target = $region36
        $region35: #{tpu_custom_call.1} parent=31 // pred_region
          %s246 = sand.u32 %s40, 1
          %s247 = scalar_lea.sflag [#allocation4], %s246
          %s248 = sand.u32 %s40, 1
          %s249 = smul.addr %s248, 8
          %s250 = scalar_lea.vmem [#allocation3], %s249
          %s252 = ssub.s32 128, 128
          %253 = vsyncadd %s247, %s252
          %s254 = smul.addr %s25, 128
          %s255 = scalar_lea.hbm %s0, %s254
          %s257 = sshll.u32 %s250, 4
          %s258 = int_to_ptr.vmem [resolvable:$true] %s257
          %260 = dma.hbm_to_vmem [thread:$0]  %s255, 128, %s258, %s247
        $region36: #{tpu_custom_call.1} parent=31 // pred_fallthru
          _
      $region32: #{tpu_custom_call.1} parent=5 // pred_fallthru
        _
      %p261 = scmp.le.s32.totalorder 1, %s18
      %p262 = scmp.lt.s32.totalorder %s18, 3
      %p263 = pnand %p261, %p262
      %p264 = pneg %p263
      // Predicated region
      $region37: #{tpu_custom_call.1} parent=5 // pred_check
        _
      $region38: #{tpu_custom_call.1} parent=5 // pred_check_branch
        %266 = sbr.rel (%p263) target = $region40
      $region39: #{tpu_custom_call.1} parent=5 // pred_region
        %s267 = ssub.s32 %s18, 1
        %s268 = sand.u32 %s43, 1
        %s269 = scalar_lea.sflag [#allocation4], %s268
        %s270 = sand.u32 %s43, 1
        %s271 = smul.addr %s270, 8
        %s272 = scalar_lea.vmem [#allocation3], %s271
        // Predicated region
        $region41: #{tpu_custom_call.1} parent=39 // pred_check
          %p273 = pneg %p56
        $region42: #{tpu_custom_call.1} parent=39 // pred_check_branch
          %275 = sbr.rel (%p273) target = $region44
        $region43: #{tpu_custom_call.1} parent=39 // pred_region
          %276 = dma.done %s269, 128
        $region44: #{tpu_custom_call.1} parent=39 // pred_fallthru
          _
        // Predicated region
        $region45: #{tpu_custom_call.1} parent=39 // pred_check
          %p277 = pneg %p82
        $region46: #{tpu_custom_call.1} parent=39 // pred_check_branch
          %279 = sbr.rel (%p277) target = $region48
        $region47: #{tpu_custom_call.1} parent=39 // pred_region
          %280 = dma.done [#allocation7], 8192
        $region48: #{tpu_custom_call.1} parent=39 // pred_fallthru
          _
        // Predicated region
        $region49: #{tpu_custom_call.1} parent=39 // pred_check
          %p281 = pneg %p134
        $region50: #{tpu_custom_call.1} parent=39 // pred_check_branch
          %283 = sbr.rel (%p281) target = $region52
        $region51: #{tpu_custom_call.1} parent=39 // pred_region
          %284 = dma.done [#allocation7], 8192
        $region52: #{tpu_custom_call.1} parent=39 // pred_fallthru
          _
        %s285 = sand.u32 %s43, 1
        %s286 = scalar_lea.sflag [#allocation4], %s285
        %s287 = sand.u32 %s43, 1
        %s288 = smul.addr %s287, 8
        %s289 = scalar_lea.vmem [#allocation3], %s288
        %p290 = pneg %p56
        %p291 = pneg %p53
        %p292 = pneg %p82
        %p293 = pneg %p79
        %s294 = smul.u32 4, %s28
        %p295 = scmp.lt.s32.totalorder %s294, 3
        %s296 = scalar_select %p295, %s294, 3
        %s297 = scalar_lea.vmem %s2, %s296
        %p298 = pneg %p108
        %p299 = pneg %p105
        %p300 = pneg %p134
        %p301 = pneg %p131
        %p302 = pneg %p155
        %p303 = pneg %p152
        %p304 = pneg %p181
        %p305 = pneg %p178
        %s306 = sand.u32 %s168, 1
        %s307 = scalar_lea.sflag [#allocation5], %s306
        %s308 = sand.u32 %s168, 1
        %s309 = smul.addr %s308, 8
        %s310 = scalar_lea.vmem [#allocation9], %s309
        %s311 = smul.u32 4, %s28
        %s312 = smul.u32 4, %s28
        %p313 = scmp.lt.s32.totalorder %s312, 3
        %s314 = scalar_select %p313, %s312, 3
        %s315 = scalar_lea.vmem %s2, %s314
        %s316 = smul.u32 4, %s28
        %s317 = smul.u32 64, %s28
        %p318 = scmp.eq.s32.totalorder %s28, 0
        // Predicated region
        $region53: #{tpu_custom_call.1} parent=39 // pred_check
          %p319 = pneg %p318
        $region54: #{tpu_custom_call.1} parent=39 // pred_check_branch
          %321 = sbr.rel (%p319) target = $region56
        $region55: #{tpu_custom_call.1} parent=39 // pred_region
          %322 = vst [vmem:[#allocation2] sm:$0xff] 0.0
        $region56: #{tpu_custom_call.1} parent=39 // pred_fallthru
          _
        %v323 = vld [vmem:[%s272] sm:$0xff]
        %v324 = vld [vmem:[#allocation6] sm:$0xff]
        %v325 = vld [vmem:[#allocation6 + $0x8] sm:$0xff]
        %v326 = vld [vmem:[#allocation6 + $0x10] sm:$0xff]
        %v327 = vld [vmem:[#allocation6 + $0x18] sm:$0xff]
        %v328 = vld [vmem:[#allocation6 + $0x20] sm:$0xff]
        %v329 = vld [vmem:[#allocation6 + $0x28] sm:$0xff]
        %v330 = vld [vmem:[#allocation6 + $0x30] sm:$0xff]
        %v331 = vld [vmem:[#allocation6 + $0x38] sm:$0xff]
        %v332 = vld [vmem:[#allocation6 + $0x40] sm:$0xff]
        %v333 = vld [vmem:[#allocation6 + $0x48] sm:$0xff]
        %v334 = vld [vmem:[#allocation6 + $0x50] sm:$0xff]
        %v335 = vld [vmem:[#allocation6 + $0x58] sm:$0xff]
        %v336 = vld [vmem:[#allocation6 + $0x60] sm:$0xff]
        %v337 = vld [vmem:[#allocation6 + $0x68] sm:$0xff]
        %v338 = vld [vmem:[#allocation6 + $0x70] sm:$0xff]
        %v339 = vld [vmem:[#allocation6 + $0x78] sm:$0xff]
        %v340 = vld [vmem:[#allocation6 + $0x80] sm:$0xff]
        %v341 = vld [vmem:[#allocation6 + $0x88] sm:$0xff]
        %v342 = vld [vmem:[#allocation6 + $0x90] sm:$0xff]
        %v343 = vld [vmem:[#allocation6 + $0x98] sm:$0xff]
        %v344 = vld [vmem:[#allocation6 + $0xa0] sm:$0xff]
        %v345 = vld [vmem:[#allocation6 + $0xa8] sm:$0xff]
        %v346 = vld [vmem:[#allocation6 + $0xb0] sm:$0xff]
        %v347 = vld [vmem:[#allocation6 + $0xb8] sm:$0xff]
        %v348 = vld [vmem:[#allocation6 + $0xc0] sm:$0xff]
        %v349 = vld [vmem:[#allocation6 + $0xc8] sm:$0xff]
        %v350 = vld [vmem:[#allocation6 + $0xd0] sm:$0xff]
        %v351 = vld [vmem:[#allocation6 + $0xd8] sm:$0xff]
        %v352 = vld [vmem:[#allocation6 + $0xe0] sm:$0xff]
        %v353 = vld [vmem:[#allocation6 + $0xe8] sm:$0xff]
        %v354 = vld [vmem:[#allocation6 + $0xf0] sm:$0xff]
        %v355 = vld [vmem:[#allocation6 + $0xf8] sm:$0xff]
        %v356 = vld [vmem:[#allocation6 + $0x100] sm:$0xff]
        %v357 = vld [vmem:[#allocation6 + $0x108] sm:$0xff]
        %v358 = vld [vmem:[#allocation6 + $0x110] sm:$0xff]
        %v359 = vld [vmem:[#allocation6 + $0x118] sm:$0xff]
        %v360 = vld [vmem:[#allocation6 + $0x120] sm:$0xff]
        %v361 = vld [vmem:[#allocation6 + $0x128] sm:$0xff]
        %v362 = vld [vmem:[#allocation6 + $0x130] sm:$0xff]
        %v363 = vld [vmem:[#allocation6 + $0x138] sm:$0xff]
        %v364 = vld [vmem:[#allocation6 + $0x140] sm:$0xff]
        %v365 = vld [vmem:[#allocation6 + $0x148] sm:$0xff]
        %v366 = vld [vmem:[#allocation6 + $0x150] sm:$0xff]
        %v367 = vld [vmem:[#allocation6 + $0x158] sm:$0xff]
        %v368 = vld [vmem:[#allocation6 + $0x160] sm:$0xff]
        %v369 = vld [vmem:[#allocation6 + $0x168] sm:$0xff]
        %v370 = vld [vmem:[#allocation6 + $0x170] sm:$0xff]
        %v371 = vld [vmem:[#allocation6 + $0x178] sm:$0xff]
        %v372 = vld [vmem:[#allocation6 + $0x180] sm:$0xff]
        %v373 = vld [vmem:[#allocation6 + $0x188] sm:$0xff]
        %v374 = vld [vmem:[#allocation6 + $0x190] sm:$0xff]
        %v375 = vld [vmem:[#allocation6 + $0x198] sm:$0xff]
        %v376 = vld [vmem:[#allocation6 + $0x1a0] sm:$0xff]
        %v377 = vld [vmem:[#allocation6 + $0x1a8] sm:$0xff]
        %v378 = vld [vmem:[#allocation6 + $0x1b0] sm:$0xff]
        %v379 = vld [vmem:[#allocation6 + $0x1b8] sm:$0xff]
        %v380 = vld [vmem:[#allocation6 + $0x1c0] sm:$0xff]
        %v381 = vld [vmem:[#allocation6 + $0x1c8] sm:$0xff]
        %v382 = vld [vmem:[#allocation6 + $0x1d0] sm:$0xff]
        %v383 = vld [vmem:[#allocation6 + $0x1d8] sm:$0xff]
        %v384 = vld [vmem:[#allocation6 + $0x1e0] sm:$0xff]
        %v385 = vld [vmem:[#allocation6 + $0x1e8] sm:$0xff]
        %v386 = vld [vmem:[#allocation6 + $0x1f0] sm:$0xff]
        %v387 = vld [vmem:[#allocation6 + $0x1f8] sm:$0xff]
        %v388 = vld [vmem:[%s315] sm:$0xf]
        %v390 = vlaneseq
        %v391 = vshrl.u32 %v390, 7
        %v392 = vsub.s32 0, %v391
        %v393 = vrot.slane %v388, %v392
        %v394 = vlaneseq
        %v395 = vshrl.u32 %v394, 7
        %v396 = vsub.s32 1, %v395
        %v397 = vrot.slane %v388, %v396
        %v398 = vlaneseq
        %v399 = vshrl.u32 %v398, 7
        %v400 = vsub.s32 2, %v399
        %v401 = vrot.slane %v388, %v400
        %v402 = vlaneseq
        %v403 = vshrl.u32 %v402, 7
        %v404 = vsub.s32 3, %v403
        %v405 = vrot.slane %v388, %v404
        %410 = vmatprep.subr.mxu0 %v325
        %411 = vmatpush1.msra.mxu0 %v324
        %412 = vmatprep.subr.mxu0 %v329
        %413 = vmatpush1.msra.mxu0 %v328
        %414 = vmatprep.subr.mxu0 %v333
        %415 = vmatpush1.msra.mxu0 %v332
        %416 = vmatprep.subr.mxu0 %v337
        %417 = vmatpush1.msra.mxu0 %v336
        %418 = vmatprep.subr.mxu0 %v341
        %419 = vmatpush1.msra.mxu0 %v340
        %420 = vmatprep.subr.mxu0 %v345
        %421 = vmatpush1.msra.mxu0 %v344
        %422 = vmatprep.subr.mxu0 %v349
        %423 = vmatpush1.msra.mxu0 %v348
        %424 = vmatprep.subr.mxu0 %v353
        %425 = vmatpush1.msra.mxu0 %v352
        %426 = vmatprep.subr.mxu0 %v357
        %427 = vmatpush1.msra.mxu0 %v356
        %428 = vmatprep.subr.mxu0 %v361
        %429 = vmatpush1.msra.mxu0 %v360
        %430 = vmatprep.subr.mxu0 %v365
        %431 = vmatpush1.msra.mxu0 %v364
        %432 = vmatprep.subr.mxu0 %v369
        %433 = vmatpush1.msra.mxu0 %v368
        %434 = vmatprep.subr.mxu0 %v373
        %435 = vmatpush1.msra.mxu0 %v372
        %436 = vmatprep.subr.mxu0 %v377
        %437 = vmatpush1.msra.mxu0 %v376
        %438 = vmatprep.subr.mxu0 %v381
        %439 = vmatpush1.msra.mxu0 %v380
        %440 = vmatprep.subr.mxu0 %v385
        %441 = vmatpush1.msra.mxu0 %v384
        %442 = vmatprep.subr.mxu0 0.0
        %443 = vmatpush1.msra.mxu0 0.0
        %444 = vmatprep.subr.mxu0 0.0
        %445 = vmatpush1.msra.mxu0 0.0
        %446 = vmatprep.subr.mxu0 0.0
        %447 = vmatpush1.msra.mxu0 0.0
        %448 = vmatprep.subr.mxu0 0.0
        %449 = vmatpush1.msra.mxu0 0.0
        %450 = vmatprep.subr.mxu0 0.0
        %451 = vmatpush1.msra.mxu0 0.0
        %452 = vmatprep.subr.mxu0 0.0
        %453 = vmatpush1.msra.mxu0 0.0
        %454 = vmatprep.subr.mxu0 0.0
        %455 = vmatpush1.msra.mxu0 0.0
        %456 = vmatprep.subr.mxu0 0.0
        %457 = vmatpush1.msra.mxu0 0.0
        %458 = vmatprep.subr.mxu0 0.0
        %459 = vmatpush1.msra.mxu0 0.0
        %460 = vmatprep.subr.mxu0 0.0
        %461 = vmatpush1.msra.mxu0 0.0
        %462 = vmatprep.subr.mxu0 0.0
        %463 = vmatpush1.msra.mxu0 0.0
        %464 = vmatprep.subr.mxu0 0.0
        %465 = vmatpush1.msra.mxu0 0.0
        %466 = vmatprep.subr.mxu0 0.0
        %467 = vmatpush1.msra.mxu0 0.0
        %468 = vmatprep.subr.mxu0 0.0
        %469 = vmatpush1.msra.mxu0 0.0
        %470 = vmatprep.subr.mxu0 0.0
        %471 = vmatpush1.msra.mxu0 0.0
        %472 = vmatprep.subr.mxu0 0.0
        %473 = vmatpush1.msra.mxu0 0.0
        %474 = vmatprep.mubr.f32.mxu0 0.0
        %475 = vmatmul.mubr.f32.gmra.mrb[0].mxu0 %v323
        %v476 = vpop.f32.mrb[0].mxu0
        %v477 = vadd.f32 %v393, %v476
        %v478 = vpop.f32.mrb[0].mxu0
        %v479 = vadd.f32 %v397, %v478
        %480 = vdwg.mxu0
        %481 = vmatprep.subr.mxu0 %v327
        %482 = vmatpush1.msra.mxu0 %v326
        %483 = vmatprep.subr.mxu0 %v331
        %484 = vmatpush1.msra.mxu0 %v330
        %485 = vmatprep.subr.mxu0 %v335
        %486 = vmatpush1.msra.mxu0 %v334
        %487 = vmatprep.subr.mxu0 %v339
        %488 = vmatpush1.msra.mxu0 %v338
        %489 = vmatprep.subr.mxu0 %v343
        %490 = vmatpush1.msra.mxu0 %v342
        %491 = vmatprep.subr.mxu0 %v347
        %492 = vmatpush1.msra.mxu0 %v346
        %493 = vmatprep.subr.mxu0 %v351
        %494 = vmatpush1.msra.mxu0 %v350
        %495 = vmatprep.subr.mxu0 %v355
        %496 = vmatpush1.msra.mxu0 %v354
        %497 = vmatprep.subr.mxu0 %v359
        %498 = vmatpush1.msra.mxu0 %v358
        %499 = vmatprep.subr.mxu0 %v363
        %500 = vmatpush1.msra.mxu0 %v362
        %501 = vmatprep.subr.mxu0 %v367
        %502 = vmatpush1.msra.mxu0 %v366
        %503 = vmatprep.subr.mxu0 %v371
        %504 = vmatpush1.msra.mxu0 %v370
        %505 = vmatprep.subr.mxu0 %v375
        %506 = vmatpush1.msra.mxu0 %v374
        %507 = vmatprep.subr.mxu0 %v379
        %508 = vmatpush1.msra.mxu0 %v378
        %509 = vmatprep.subr.mxu0 %v383
        %510 = vmatpush1.msra.mxu0 %v382
        %511 = vmatprep.subr.mxu0 %v387
        %512 = vmatpush1.msra.mxu0 %v386
        %513 = vmatprep.subr.mxu0 0.0
        %514 = vmatpush1.msra.mxu0 0.0
        %515 = vmatprep.subr.mxu0 0.0
        %516 = vmatpush1.msra.mxu0 0.0
        %517 = vmatprep.subr.mxu0 0.0
        %518 = vmatpush1.msra.mxu0 0.0
        %519 = vmatprep.subr.mxu0 0.0
        %520 = vmatpush1.msra.mxu0 0.0
        %521 = vmatprep.subr.mxu0 0.0
        %522 = vmatpush1.msra.mxu0 0.0
        %523 = vmatprep.subr.mxu0 0.0
        %524 = vmatpush1.msra.mxu0 0.0
        %525 = vmatprep.subr.mxu0 0.0
        %526 = vmatpush1.msra.mxu0 0.0
        %527 = vmatprep.subr.mxu0 0.0
        %528 = vmatpush1.msra.mxu0 0.0
        %529 = vmatprep.subr.mxu0 0.0
        %530 = vmatpush1.msra.mxu0 0.0
        %531 = vmatprep.subr.mxu0 0.0
        %532 = vmatpush1.msra.mxu0 0.0
        %533 = vmatprep.subr.mxu0 0.0
        %534 = vmatpush1.msra.mxu0 0.0
        %535 = vmatprep.subr.mxu0 0.0
        %536 = vmatpush1.msra.mxu0 0.0
        %537 = vmatprep.subr.mxu0 0.0
        %538 = vmatpush1.msra.mxu0 0.0
        %539 = vmatprep.subr.mxu0 0.0
        %540 = vmatpush1.msra.mxu0 0.0
        %541 = vmatprep.subr.mxu0 0.0
        %542 = vmatpush1.msra.mxu0 0.0
        %543 = vmatprep.subr.mxu0 0.0
        %544 = vmatpush1.msra.mxu0 0.0
        %545 = vmatprep.mubr.f32.mxu0 0.0
        %546 = vmatmul.mubr.f32.gmra.mrb[0].mxu0 %v323
        %v547 = vpop.f32.mrb[0].mxu0
        %v548 = vadd.f32 %v401, %v547
        %v549 = vpop.f32.mrb[0].mxu0
        %v550 = vadd.f32 %v405, %v549
        %551 = vdwg.mxu0
        %v552 = vmul.f32 %v477, 0.7978846
        %v553 = vmul.f32 %v479, 0.7978846
        %v554 = vmul.f32 %v548, 0.7978846
        %v555 = vmul.f32 %v550, 0.7978846
        %v556 = vmul.f32 %v477, 0.044715
        %v557 = vmul.f32 %v479, 0.044715
        %v558 = vmul.f32 %v548, 0.044715
        %v559 = vmul.f32 %v550, 0.044715
        %v560 = vmul.f32 %v556, %v477
        %v561 = vmul.f32 %v557, %v479
        %v562 = vmul.f32 %v558, %v548
        %v563 = vmul.f32 %v559, %v550
        %v564 = vadd.f32 %v560, 1.0
        %v565 = vadd.f32 %v561, 1.0
        %v566 = vadd.f32 %v562, 1.0
        %v567 = vadd.f32 %v563, 1.0
        %v568 = vmul.f32 %v552, %v564
        %v569 = vmul.f32 %v553, %v565
        %v570 = vmul.f32 %v554, %v566
        %v571 = vmul.f32 %v555, %v567
        %v572 = vmul.f32 %v477, 0.5
        %v573 = vmul.f32 %v479, 0.5
        %v574 = vmul.f32 %v548, 0.5
        %v575 = vmul.f32 %v550, 0.5
        %v576 = vtanh.pop %v568
        %v577 = vtanh.pop %v569
        %v578 = vtanh.pop %v570
        %v579 = vtanh.pop %v571
        %v580 = vadd.f32 %v576, 1.0
        %v581 = vadd.f32 %v577, 1.0
        %v582 = vadd.f32 %v578, 1.0
        %v583 = vadd.f32 %v579, 1.0
        %v584 = vmul.f32 %v572, %v580
        %v585 = vmul.f32 %v573, %v581
        %v586 = vmul.f32 %v574, %v582
        %v587 = vmul.f32 %v575, %v583
        %v588 = vld [vmem:[#allocation2] sm:$0xff]
        %v589 = vld [vmem:[#allocation8] sm:$0xff]
        %v590 = vld [vmem:[#allocation8 + $0x8] sm:$0xff]
        %v591 = vld [vmem:[#allocation8 + $0x10] sm:$0xff]
        %v592 = vld [vmem:[#allocation8 + $0x18] sm:$0xff]
        %v593 = vld [vmem:[#allocation8 + $0x20] sm:$0xff]
        %v594 = vld [vmem:[#allocation8 + $0x28] sm:$0xff]
        %v595 = vld [vmem:[#allocation8 + $0x30] sm:$0xff]
        %v596 = vld [vmem:[#allocation8 + $0x38] sm:$0xff]
        %v597 = vld [vmem:[#allocation8 + $0x40] sm:$0xff]
        %v598 = vld [vmem:[#allocation8 + $0x48] sm:$0xff]
        %v599 = vld [vmem:[#allocation8 + $0x50] sm:$0xff]
        %v600 = vld [vmem:[#allocation8 + $0x58] sm:$0xff]
        %v601 = vld [vmem:[#allocation8 + $0x60] sm:$0xff]
        %v602 = vld [vmem:[#allocation8 + $0x68] sm:$0xff]
        %v603 = vld [vmem:[#allocation8 + $0x70] sm:$0xff]
        %v604 = vld [vmem:[#allocation8 + $0x78] sm:$0xff]
        %v605 = vld [vmem:[#allocation8 + $0x80] sm:$0xff]
        %v606 = vld [vmem:[#allocation8 + $0x88] sm:$0xff]
        %v607 = vld [vmem:[#allocation8 + $0x90] sm:$0xff]
        %v608 = vld [vmem:[#allocation8 + $0x98] sm:$0xff]
        %v609 = vld [vmem:[#allocation8 + $0xa0] sm:$0xff]
        %v610 = vld [vmem:[#allocation8 + $0xa8] sm:$0xff]
        %v611 = vld [vmem:[#allocation8 + $0xb0] sm:$0xff]
        %v612 = vld [vmem:[#allocation8 + $0xb8] sm:$0xff]
        %v613 = vld [vmem:[#allocation8 + $0xc0] sm:$0xff]
        %v614 = vld [vmem:[#allocation8 + $0xc8] sm:$0xff]
        %v615 = vld [vmem:[#allocation8 + $0xd0] sm:$0xff]
        %v616 = vld [vmem:[#allocation8 + $0xd8] sm:$0xff]
        %v617 = vld [vmem:[#allocation8 + $0xe0] sm:$0xff]
        %v618 = vld [vmem:[#allocation8 + $0xe8] sm:$0xff]
        %v619 = vld [vmem:[#allocation8 + $0xf0] sm:$0xff]
        %v620 = vld [vmem:[#allocation8 + $0xf8] sm:$0xff]
        %v621 = vld [vmem:[#allocation8 + $0x100] sm:$0xff]
        %v622 = vld [vmem:[#allocation8 + $0x108] sm:$0xff]
        %v623 = vld [vmem:[#allocation8 + $0x110] sm:$0xff]
        %v624 = vld [vmem:[#allocation8 + $0x118] sm:$0xff]
        %v625 = vld [vmem:[#allocation8 + $0x120] sm:$0xff]
        %v626 = vld [vmem:[#allocation8 + $0x128] sm:$0xff]
        %v627 = vld [vmem:[#allocation8 + $0x130] sm:$0xff]
        %v628 = vld [vmem:[#allocation8 + $0x138] sm:$0xff]
        %v629 = vld [vmem:[#allocation8 + $0x140] sm:$0xff]
        %v630 = vld [vmem:[#allocation8 + $0x148] sm:$0xff]
        %v631 = vld [vmem:[#allocation8 + $0x150] sm:$0xff]
        %v632 = vld [vmem:[#allocation8 + $0x158] sm:$0xff]
        %v633 = vld [vmem:[#allocation8 + $0x160] sm:$0xff]
        %v634 = vld [vmem:[#allocation8 + $0x168] sm:$0xff]
        %v635 = vld [vmem:[#allocation8 + $0x170] sm:$0xff]
        %v636 = vld [vmem:[#allocation8 + $0x178] sm:$0xff]
        %v637 = vld [vmem:[#allocation8 + $0x180] sm:$0xff]
        %v638 = vld [vmem:[#allocation8 + $0x188] sm:$0xff]
        %v639 = vld [vmem:[#allocation8 + $0x190] sm:$0xff]
        %v640 = vld [vmem:[#allocation8 + $0x198] sm:$0xff]
        %v641 = vld [vmem:[#allocation8 + $0x1a0] sm:$0xff]
        %v642 = vld [vmem:[#allocation8 + $0x1a8] sm:$0xff]
        %v643 = vld [vmem:[#allocation8 + $0x1b0] sm:$0xff]
        %v644 = vld [vmem:[#allocation8 + $0x1b8] sm:$0xff]
        %v645 = vld [vmem:[#allocation8 + $0x1c0] sm:$0xff]
        %v646 = vld [vmem:[#allocation8 + $0x1c8] sm:$0xff]
        %v647 = vld [vmem:[#allocation8 + $0x1d0] sm:$0xff]
        %v648 = vld [vmem:[#allocation8 + $0x1d8] sm:$0xff]
        %v649 = vld [vmem:[#allocation8 + $0x1e0] sm:$0xff]
        %v650 = vld [vmem:[#allocation8 + $0x1e8] sm:$0xff]
        %v651 = vld [vmem:[#allocation8 + $0x1f0] sm:$0xff]
        %v652 = vld [vmem:[#allocation8 + $0x1f8] sm:$0xff]
        %653 = vmatprep.subr.mxu0 0.0
        %654 = vmatpush1.msra.mxu0 %v589
        %655 = vmatprep.subr.mxu0 0.0
        %656 = vmatpush1.msra.mxu0 %v590
        %657 = vmatprep.subr.mxu0 0.0
        %658 = vmatpush1.msra.mxu0 %v591
        %659 = vmatprep.subr.mxu0 0.0
        %660 = vmatpush1.msra.mxu0 %v592
        %661 = vmatprep.subr.mxu0 0.0
        %662 = vmatpush1.msra.mxu0 %v593
        %663 = vmatprep.subr.mxu0 0.0
        %664 = vmatpush1.msra.mxu0 %v594
        %665 = vmatprep.subr.mxu0 0.0
        %666 = vmatpush1.msra.mxu0 %v595
        %667 = vmatprep.subr.mxu0 0.0
        %668 = vmatpush1.msra.mxu0 %v596
        %669 = vmatprep.subr.mxu0 0.0
        %670 = vmatpush1.msra.mxu0 %v597
        %671 = vmatprep.subr.mxu0 0.0
        %672 = vmatpush1.msra.mxu0 %v598
        %673 = vmatprep.subr.mxu0 0.0
        %674 = vmatpush1.msra.mxu0 %v599
        %675 = vmatprep.subr.mxu0 0.0
        %676 = vmatpush1.msra.mxu0 %v600
        %677 = vmatprep.subr.mxu0 0.0
        %678 = vmatpush1.msra.mxu0 %v601
        %679 = vmatprep.subr.mxu0 0.0
        %680 = vmatpush1.msra.mxu0 %v602
        %681 = vmatprep.subr.mxu0 0.0
        %682 = vmatpush1.msra.mxu0 %v603
        %683 = vmatprep.subr.mxu0 0.0
        %684 = vmatpush1.msra.mxu0 %v604
        %685 = vmatprep.subr.mxu0 0.0
        %686 = vmatpush1.msra.mxu0 %v605
        %687 = vmatprep.subr.mxu0 0.0
        %688 = vmatpush1.msra.mxu0 %v606
        %689 = vmatprep.subr.mxu0 0.0
        %690 = vmatpush1.msra.mxu0 %v607
        %691 = vmatprep.subr.mxu0 0.0
        %692 = vmatpush1.msra.mxu0 %v608
        %693 = vmatprep.subr.mxu0 0.0
        %694 = vmatpush1.msra.mxu0 %v609
        %695 = vmatprep.subr.mxu0 0.0
        %696 = vmatpush1.msra.mxu0 %v610
        %697 = vmatprep.subr.mxu0 0.0
        %698 = vmatpush1.msra.mxu0 %v611
        %699 = vmatprep.subr.mxu0 0.0
        %700 = vmatpush1.msra.mxu0 %v612
        %701 = vmatprep.subr.mxu0 0.0
        %702 = vmatpush1.msra.mxu0 %v613
        %703 = vmatprep.subr.mxu0 0.0
        %704 = vmatpush1.msra.mxu0 %v614
        %705 = vmatprep.subr.mxu0 0.0
        %706 = vmatpush1.msra.mxu0 %v615
        %707 = vmatprep.subr.mxu0 0.0
        %708 = vmatpush1.msra.mxu0 %v616
        %709 = vmatprep.subr.mxu0 0.0
        %710 = vmatpush1.msra.mxu0 %v617
        %711 = vmatprep.subr.mxu0 0.0
        %712 = vmatpush1.msra.mxu0 %v618
        %713 = vmatprep.subr.mxu0 0.0
        %714 = vmatpush1.msra.mxu0 %v619
        %715 = vmatprep.subr.mxu0 0.0
        %716 = vmatpush1.msra.mxu0 %v620
        %717 = vmatprep.mubr.f32.mxu0 %v585
        %718 = vmatmul.mubr.f32.gmra.mrb[0].mxu0 %v584
        %v719 = vpop.f32.mrb[0].mxu0
        %v720 = vadd.f32 0.0, %v719
        %v721 = vpop.f32.mrb[0].mxu0
        %722 = vdwg.mxu0
        %723 = vmatprep.subr.mxu0 0.0
        %724 = vmatpush1.msra.mxu0 %v621
        %725 = vmatprep.subr.mxu0 0.0
        %726 = vmatpush1.msra.mxu0 %v622
        %727 = vmatprep.subr.mxu0 0.0
        %728 = vmatpush1.msra.mxu0 %v623
        %729 = vmatprep.subr.mxu0 0.0
        %730 = vmatpush1.msra.mxu0 %v624
        %731 = vmatprep.subr.mxu0 0.0
        %732 = vmatpush1.msra.mxu0 %v625
        %733 = vmatprep.subr.mxu0 0.0
        %734 = vmatpush1.msra.mxu0 %v626
        %735 = vmatprep.subr.mxu0 0.0
        %736 = vmatpush1.msra.mxu0 %v627
        %737 = vmatprep.subr.mxu0 0.0
        %738 = vmatpush1.msra.mxu0 %v628
        %739 = vmatprep.subr.mxu0 0.0
        %740 = vmatpush1.msra.mxu0 %v629
        %741 = vmatprep.subr.mxu0 0.0
        %742 = vmatpush1.msra.mxu0 %v630
        %743 = vmatprep.subr.mxu0 0.0
        %744 = vmatpush1.msra.mxu0 %v631
        %745 = vmatprep.subr.mxu0 0.0
        %746 = vmatpush1.msra.mxu0 %v632
        %747 = vmatprep.subr.mxu0 0.0
        %748 = vmatpush1.msra.mxu0 %v633
        %749 = vmatprep.subr.mxu0 0.0
        %750 = vmatpush1.msra.mxu0 %v634
        %751 = vmatprep.subr.mxu0 0.0
        %752 = vmatpush1.msra.mxu0 %v635
        %753 = vmatprep.subr.mxu0 0.0
        %754 = vmatpush1.msra.mxu0 %v636
        %755 = vmatprep.subr.mxu0 0.0
        %756 = vmatpush1.msra.mxu0 %v637
        %757 = vmatprep.subr.mxu0 0.0
        %758 = vmatpush1.msra.mxu0 %v638
        %759 = vmatprep.subr.mxu0 0.0
        %760 = vmatpush1.msra.mxu0 %v639
        %761 = vmatprep.subr.mxu0 0.0
        %762 = vmatpush1.msra.mxu0 %v640
        %763 = vmatprep.subr.mxu0 0.0
        %764 = vmatpush1.msra.mxu0 %v641
        %765 = vmatprep.subr.mxu0 0.0
        %766 = vmatpush1.msra.mxu0 %v642
        %767 = vmatprep.subr.mxu0 0.0
        %768 = vmatpush1.msra.mxu0 %v643
        %769 = vmatprep.subr.mxu0 0.0
        %770 = vmatpush1.msra.mxu0 %v644
        %771 = vmatprep.subr.mxu0 0.0
        %772 = vmatpush1.msra.mxu0 %v645
        %773 = vmatprep.subr.mxu0 0.0
        %774 = vmatpush1.msra.mxu0 %v646
        %775 = vmatprep.subr.mxu0 0.0
        %776 = vmatpush1.msra.mxu0 %v647
        %777 = vmatprep.subr.mxu0 0.0
        %778 = vmatpush1.msra.mxu0 %v648
        %779 = vmatprep.subr.mxu0 0.0
        %780 = vmatpush1.msra.mxu0 %v649
        %781 = vmatprep.subr.mxu0 0.0
        %782 = vmatpush1.msra.mxu0 %v650
        %783 = vmatprep.subr.mxu0 0.0
        %784 = vmatpush1.msra.mxu0 %v651
        %785 = vmatprep.subr.mxu0 0.0
        %786 = vmatpush1.msra.mxu0 %v652
        %787 = vmatprep.mubr.f32.mxu0 %v587
        %788 = vmatmul.mubr.f32.gmra.mrb[0].mxu0 %v586
        %v789 = vpop.f32.mrb[0].mxu0
        %v790 = vadd.f32 %v720, %v789
        %v791 = vpop.f32.mrb[0].mxu0
        %792 = vdwg.mxu0
        %v793 = vadd.f32 %v588, %v790
        %794 = vst [vmem:[#allocation2] sm:$0xff] %v793
        // Predicated region
        $region57: #{tpu_custom_call.1} parent=39 // pred_check
          %p795 = pneg %p318
        $region58: #{tpu_custom_call.1} parent=39 // pred_check_branch
          %797 = sbr.rel (%p795) target = $region60
        $region59: #{tpu_custom_call.1} parent=39 // pred_region
          %v798 = vld [vmem:[#allocation2] sm:$0xff]
          %v799 = vld [vmem:[%s4] sm:$0x1]
          %v801 = vlaneseq
          %v802 = vshrl.u32 %v801, 7
          %v803 = vsub.s32 0, %v802
          %v804 = vrot.slane %v799, %v803
          %v806 = vadd.f32 %v798, %v804
          %807 = vst [vmem:[%s310] sm:$0xff] %v806
        $region60: #{tpu_custom_call.1} parent=39 // pred_fallthru
          _
        %s808 = sand.u32 %s168, 1
        %s809 = scalar_lea.sflag [#allocation5], %s808
        %s810 = sand.u32 %s168, 1
        %s811 = smul.addr %s810, 8
        %s812 = scalar_lea.vmem [#allocation9], %s811
        // Predicated region
        $region61: #{tpu_custom_call.1} parent=39 // pred_check
          %p813 = pneg %p178
        $region62: #{tpu_custom_call.1} parent=39 // pred_check_branch
          %815 = sbr.rel (%p813) target = $region64
        $region63: #{tpu_custom_call.1} parent=39 // pred_region
          %s817 = ssub.s32 128, 128
          %818 = vsyncadd %s809, %s817
          %s819 = smul.addr %s27, 128
          %s820 = scalar_lea.hbm %s5, %s819
          %s822 = sshll.u32 %s812, 4
          %s823 = int_to_ptr.vmem [resolvable:$true] %s822
          %825 = dma.vmem_to_hbm [thread:$0]  %s823, 128, %s820, %s809
        $region64: #{tpu_custom_call.1} parent=39 // pred_fallthru
          _
      $region40: #{tpu_custom_call.1} parent=5 // pred_fallthru
        _
      %p826 = scmp.le.s32.totalorder 2, %s18
      // Predicated region
      $region65: #{tpu_custom_call.1} parent=5 // pred_check
        %p827 = pneg %p826
      $region66: #{tpu_custom_call.1} parent=5 // pred_check_branch
        %829 = sbr.rel (%p827) target = $region68
      $region67: #{tpu_custom_call.1} parent=5 // pred_region
        %s830 = ssub.s32 %s18, 2
        // Predicated region
        $region69: #{tpu_custom_call.1} parent=67 // pred_check
          %p831 = pneg %p184
        $region70: #{tpu_custom_call.1} parent=67 // pred_check_branch
          %833 = sbr.rel (%p831) target = $region72
        $region71: #{tpu_custom_call.1} parent=67 // pred_region
          %s834 = sand.u32 %s169, 1
          %s835 = scalar_lea.sflag [#allocation5], %s834
          %s836 = sand.u32 %s169, 1
          %s837 = smul.addr %s836, 8
          %s838 = scalar_lea.vmem [#allocation9], %s837
          %839 = dma.done %s835, 128
        $region72: #{tpu_custom_call.1} parent=67 // pred_fallthru
          _
      $region68: #{tpu_custom_call.1} parent=5 // pred_fallthru
        _
    $region6: #{tpu_custom_call.1} parent=1 // loop_footer
      %s22 = sadd.s32 1, %s18
    $region7: #{tpu_custom_call.1} parent=1 // loop_footer_branch
      %17 = sbr.rel target = $region3
    $region8: #{tpu_custom_call.1} parent=1 // loop_exit
      _
    %840 = vsyncpa [#allocation4], 1
    %s841 = scalar_lea.sflag [#allocation4], 1
    %842 = vsyncpa %s841, 1
    %843 = vsyncpa [#allocation7], 1
    %844 = vsyncpa [#allocation5], 1
    %s845 = scalar_lea.sflag [#allocation5], 1
    %846 = vsyncpa %s845, 1

</llo_original>
